<compile_context>
chip_gen: v7x
topology: tpu7x:2x2x1
jax: 0.10.0
libtpu: 0.0.40
codegen_flags: <defaults>
</compile_context>

<pallas_src>
import functools

import jax
import jax.numpy as jnp
from jax.experimental import pallas as pl
from jax.experimental.pallas import tpu as pltpu

EPS = 1e-5
# Below this channel_mult the cm x cm middle layers use VPU broadcast-FMAs
# instead of the MXU (push cadence + MRF pops don't pay off at K=M=8).
_VPU_SMALL_CM = 32


# ----------------------------------------------------------------------------
# Kernel
# ----------------------------------------------------------------------------
def _ae_kernel(x_ref, wf_ref, bf_ref, wc2_ref, bc2_ref, wc3_ref, bc3_ref,
               wbig_ref, bbig_ref, wd4_ref, bd4_ref, wd5_ref, bd5_ref,
               wl_ref, bl_ref, o_ref, *, vpu_small):
    """Per-pixel AE chain; channels on sublanes, pixels on lanes.

    x_ref  : (2, T)            input tile (T pixels spanning batch*H*W)
    wf_ref : (cm, 2)  f32      conv1 weight with BN0 & BN1 folded
    bf_ref : (cm, 1)  f32      conv1 folded bias
    wc2_ref: (cm, cm)          conv2 folded weight        (LeakyReLU)
    wc3_ref: (2cm, cm)         conv3 folded weight        (LeakyReLU)
    wbig_ref: (4, 2cm, 2cm)    conv4, deconv1..3 weights  (Leaky, ReLU x3)
    wd4_ref: (cm, 2cm)         deconv4 folded weight      (ReLU)
    wd5_ref: (cm, cm)          deconv5 folded weight      (ReLU)
    wl_ref : (cm, 2)  f32      deconv6 folded weight, stored transposed (Cin, Cout)
    b*_ref : matching (Cout, 1) f32 folded biases
    o_ref  : (2, T)            output tile (after Sigmoid)
    """
    leaky = lambda v: jnp.where(v > 0, v, 0.2 * v)   # LeakyReLU(0.2)
    relu = lambda v: jnp.maximum(v, 0.0)

    def mxu_layer(w, b, h, act):
        # weights may be bf16; accumulate in f32; bias/activation stay f32 (v5e-safe)
        y = jnp.dot(w, h.astype(w.dtype), preferred_element_type=jnp.float32)
        return act(y + b)

    def vpu_layer(w, b, h, act):
        # (Cout, Cin) @ (Cin, T) as Cin broadcast-FMAs on the VPU — no MXU push.
        w = w.astype(jnp.float32)
        cin = w.shape[1]
        acc = w[:, 0:1] * h[0:1, :]
        for k in range(1, cin):
            acc = acc + w[:, k:k + 1] * h[k:k + 1, :]
        return act(acc + b)

    small_layer = vpu_layer if vpu_small else mxu_layer

    x = x_ref[...]                                    # (2, T) f32
    wf = wf_ref[...]                                  # (cm, 2) f32

    # ---- encoder conv1 (Cin=2): two VPU broadcast-FMAs instead of a K=2 matmul
    h = leaky(wf[:, 0:1] * x[0:1, :] + wf[:, 1:2] * x[1:2, :] + bf_ref[...])

    # ---- encoder conv2..conv4 ----
    h = small_layer(wc2_ref[...], bc2_ref[...], h, leaky)     # (cm,  T)
    h = mxu_layer(wc3_ref[...], bc3_ref[...], h, leaky)       # (2cm, T)
    h = mxu_layer(wbig_ref[0], bbig_ref[0], h, leaky)         # conv4

    # ---- decoder deconv1..deconv3 (2cm x 2cm, ReLU) ----
    for li in range(1, 4):
        h = mxu_layer(wbig_ref[li], bbig_ref[li], h, relu)

    # ---- decoder deconv4, deconv5 ----
    h = mxu_layer(wd4_ref[...], bd4_ref[...], h, relu)         # (cm, T)
    h = small_layer(wd5_ref[...], bd5_ref[...], h, relu)       # (cm, T)

    # ---- decoder deconv6 (Cout=2): VPU multiply + sublane reduce, no MXU.
    # Two direct row stores instead of a sublane concatenate.
    wl = wl_ref[...]                                           # (cm, 2) f32
    y0 = jnp.sum(wl[:, 0:1] * h, axis=0, keepdims=True)        # (1, T)
    y1 = jnp.sum(wl[:, 1:2] * h, axis=0, keepdims=True)        # (1, T)
    o_ref[0:1, :] = jax.nn.sigmoid(y0 + bl_ref[0:1, :])
    o_ref[1:2, :] = jax.nn.sigmoid(y1 + bl_ref[1:2, :])


# ----------------------------------------------------------------------------
# Parameters (raw = PyTorch-like per-layer params; folded = kernel params)
# ----------------------------------------------------------------------------
def init_raw_params(channel_mult, key):
    """Deterministic synthetic parameters matching the PyTorch module shapes.

    Weights are stored as per-pixel (Cout, Cin) matrices; for Conv2d this is
    weight[:, :, 0, 0], for ConvTranspose2d it is weight[:, :, 0, 0].T.
    All convs are bias=False, matching the module spec.
    """
    cm = channel_mult
    keys = iter(jax.random.split(key, 64))

    def wmat(cout, cin):
        return 0.2 * jax.random.normal(next(keys), (cout, cin), dtype=jnp.float32)

    def bn(c):
        gamma = 1.0 + 0.1 * jax.random.normal(next(keys), (c,), dtype=jnp.float32)
        beta = 0.1 * jax.random.normal(next(keys), (c,), dtype=jnp.float32)
        mean = 0.1 * jax.random.normal(next(keys), (c,), dtype=jnp.float32)
        var = 1.0 + 0.1 * jax.random.uniform(next(keys), (c,), dtype=jnp.float32)
        return (gamma, beta, mean, var)

    return {
        "bn0": bn(2),
        "convs": [
            (wmat(cm, 2), bn(cm)),
            (wmat(cm, cm), bn(cm)),
            (wmat(2 * cm, cm), bn(2 * cm)),
            (wmat(2 * cm, 2 * cm), bn(2 * cm)),
        ],
        "deconvs": [
            (wmat(2 * cm, 2 * cm), bn(2 * cm)),
            (wmat(2 * cm, 2 * cm), bn(2 * cm)),
            (wmat(2 * cm, 2 * cm), bn(2 * cm)),
            (wmat(cm, 2 * cm), bn(cm)),
            (wmat(cm, cm), bn(cm)),
            (wmat(2, cm), bn(2)),
        ],
    }


def _bn_scale_bias(bn):
    gamma, beta, mean, var = bn
    s = gamma / jnp.sqrt(var + EPS)
    b = beta - mean * s
    return s, b


def fold_params(raw, channel_mult, mm_dtype=jnp.bfloat16):
    """Fold every BatchNorm into the adjacent conv/deconv weight & bias.

    MXU-bound weights are cast to `mm_dtype` (bf16 by default); VPU-path
    weights and every bias stay f32.  No zero-padding of the narrow layers.
    """
    cm = channel_mult
    cm2 = 2 * cm
    small_on_vpu = cm < _VPU_SMALL_CM
    small_dtype = jnp.float32 if small_on_vpu else mm_dtype

    s0, b0 = _bn_scale_bias(raw["bn0"])

    # first conv: fold the input BN (s0, b0) and its own BN (s1, c1)
    w1, bn1 = raw["convs"][0]
    s1, c1 = _bn_scale_bias(bn1)
    wf = (s1[:, None] * w1) * s0[None, :]              # (cm, 2) f32
    bf = (s1 * (w1 @ b0) + c1).reshape(cm, 1)          # (cm, 1) f32

    def fold(w, bnd):
        s, b = _bn_scale_bias(bnd)
        return s[:, None] * w, b.reshape(-1, 1)

    wc2, bc2 = fold(*raw["convs"][1])                  # (cm,  cm)
    wc3, bc3 = fold(*raw["convs"][2])                  # (2cm, cm)
    big = [fold(*raw["convs"][3])] + [fold(*raw["deconvs"][i]) for i in range(3)]
    wbig = jnp.stack([w for w, _ in big])              # (4, 2cm, 2cm)
    bbig = jnp.stack([b for _, b in big])              # (4, 2cm, 1)
    wd4, bd4 = fold(*raw["deconvs"][3])                # (cm, 2cm)
    wd5, bd5 = fold(*raw["deconvs"][4])                # (cm, cm)

    # last deconv: fold its BN; store transposed (Cin, Cout) for the VPU path
    wL, bnL = raw["deconvs"][5]
    sL, cL = _bn_scale_bias(bnL)
    wl = (sL[:, None] * wL).T                          # (cm, 2) f32
    bl = cL.reshape(2, 1)                              # (2, 1)  f32

    return (wf, bf,
            wc2.astype(small_dtype), bc2,
            wc3.astype(mm_dtype), bc3,
            wbig.astype(mm_dtype), bbig,
            wd4.astype(mm_dtype), bd4,
            wd5.astype(small_dtype), bd5,
            wl, bl)


# ----------------------------------------------------------------------------
# Wrapper
# ----------------------------------------------------------------------------
def _pick_tile(total_px, cmax):
    """Largest lane tile that (a) divides total_px, (b) fits a conservative
    VMEM budget valid on v5e/v6e/v7x default scoped VMEM, (c) leaves >=2 grid
    steps when possible (so v7x's second TensorCore gets work)."""
    assert total_px % 128 == 0
    budget = 12 * 1024 * 1024                      # under default scoped VMEM everywhere
    per_px = 4 * (5 * cmax + 8)                    # ~5 live (cmax,T) f32 temps + dbl-buffered I/O
    cap = max(128, min(16384, (budget // per_px) // 128 * 128))
    start = min(cap, (total_px // 2) // 128 * 128)
    for t in range(start, 127, -128):
        if total_px % t == 0:
            return t
    return min(total_px, cap)                      # total_px == 128 -> single tile


def ae_cnn_forward(x_nchw, folded, *, tile_hw=None):
    """x_nchw: (N, 2, H, W) float32 -> (N, 2, H, W) float32."""
    n, c, hgt, wid = x_nchw.shape
    assert c == 2
    total = n * hgt * wid

    (wf, bf, wc2, bc2, wc3, bc3, wbig, bbig, wd4, bd4, wd5, bd5, wl, bl) = folded
    cm = wf.shape[0]
    cmax = 2 * cm
    vpu_small = cm < _VPU_SMALL_CM

    if tile_hw is None:
        tile_hw = _pick_tile(total, cmax)
    # TODO(synk): pad / mask the pixel axis when N*H*W is not a multiple of 128.
    assert total % tile_hw == 0 and tile_hw % 128 == 0

    # Flatten batch into the pixel axis: channels on sublanes, all pixels on lanes.
    x2 = x_nchw.reshape(n, 2, hgt * wid).transpose(1, 0, 2).reshape(2, total)

    grid = (total // tile_hw,)
    const2 = lambda t: (0, 0)
    const3 = lambda t: (0, 0, 0)
    full = lambda a: pl.BlockSpec(a.shape, const3 if a.ndim == 3 else const2)

    out = pl.pallas_call(
        functools.partial(_ae_kernel, vpu_small=vpu_small),
        out_shape=jax.ShapeDtypeStruct((2, total), jnp.float32),
        grid_spec=pltpu.PrefetchScalarGridSpec(
            num_scalar_prefetch=0,
            grid=grid,
            in_specs=[
                pl.BlockSpec((2, tile_hw), lambda t: (0, t)),
                full(wf), full(bf),
                full(wc2), full(bc2),
                full(wc3), full(bc3),
                full(wbig), full(bbig),
                full(wd4), full(bd4),
                full(wd5), full(bd5),
                full(wl), full(bl),
            ],
            out_specs=pl.BlockSpec((2, tile_hw), lambda t: (0, t)),
        ),
        compiler_params=pltpu.CompilerParams(
            dimension_semantics=("parallel",)),
    )(x2, wf, bf, wc2, bc2, wc3, bc3, wbig, bbig, wd4, bd4, wd5, bd5, wl, bl)

    return out.reshape(2, n, hgt * wid).transpose(1, 0, 2).reshape(n, 2, hgt, wid)


# ----------------------------------------------------------------------------
# Plain-JAX reference (un-folded params, NCHW) for correctness check
# ----------------------------------------------------------------------------
def _reference_forward(x, raw):
    def bn_apply(h, bnd):
        g, b, m, v = bnd
        inv = g / jnp.sqrt(v + EPS)
        return (h - m[None, :, None, None]) * inv[None, :, None, None] \
            + b[None, :, None, None]

    def conv1x1(h, wmat):
        return jnp.einsum('oc,nchw->nohw', wmat, h)

    leaky = lambda v: jnp.where(v > 0, v, 0.2 * v)
    relu = lambda v: jnp.maximum(v, 0.0)

    h = bn_apply(x, raw["bn0"])
    for wmat, bnd in raw["convs"]:
        h = leaky(bn_apply(conv1x1(h, wmat), bnd))
    n_dec = len(raw["deconvs"])
    for i, (wmat, bnd) in enumerate(raw["deconvs"]):
        h = bn_apply(conv1x1(h, wmat), bnd)
        h = jax.nn.sigmoid(h) if i == n_dec - 1 else relu(h)
    return h


if __name__ == "__main__":
    key = jax.random.PRNGKey(0)
    k_x, k_p = jax.random.split(key)

    channel_mult = 8
    N, C, H, W = 2, 2, 16, 16            # Conv2d(in_channels=2) forces C=2
    x = jax.random.normal(k_x, (N, C, H, W), dtype=jnp.float32)

    raw = init_raw_params(channel_mult, k_p)
    y_ref = _reference_forward(x, raw)

    fwd = jax.jit(ae_cnn_forward)

    # exact path (f32 MXU operands) — tight tolerance
    folded_f32 = fold_params(raw, channel_mult, mm_dtype=jnp.float32)
    y32 = jax.block_until_ready(fwd(x, folded_f32))
    assert y32.shape == (N, C, H, W)
    assert jnp.allclose(y32, y_ref, atol=1e-4, rtol=1e-4), \
        float(jnp.max(jnp.abs(y32 - y_ref)))

    # fast path (bf16 MXU operands, f32 accumulation) — loose tolerance
    folded_bf16 = fold_params(raw, channel_mult, mm_dtype=jnp.bfloat16)
    y16 = jax.block_until_ready(fwd(x, folded_bf16))
    assert y16.shape == (N, C, H, W)
    assert jnp.allclose(y16, y_ref, atol=5e-2, rtol=5e-2), \
        float(jnp.max(jnp.abs(y16 - y_ref)))

    print("KERNEL_OK")
</pallas_src>

<mosaic_0001>
module attributes {stable_mosaic.version = 11 : i64} {
  func.func @_ae_kernel(%arg0: i32, %arg1: memref<2x256xf32, #tpu.memory_space<vmem>>, %arg2: memref<8x2xf32, #tpu.memory_space<vmem>>, %arg3: memref<8x1xf32, #tpu.memory_space<vmem>>, %arg4: memref<8x8xf32, #tpu.memory_space<vmem>>, %arg5: memref<8x1xf32, #tpu.memory_space<vmem>>, %arg6: memref<16x8xf32, #tpu.memory_space<vmem>>, %arg7: memref<16x1xf32, #tpu.memory_space<vmem>>, %arg8: memref<4x16x16xf32, #tpu.memory_space<vmem>>, %arg9: memref<4x16x1xf32, #tpu.memory_space<vmem>>, %arg10: memref<8x16xf32, #tpu.memory_space<vmem>>, %arg11: memref<8x1xf32, #tpu.memory_space<vmem>>, %arg12: memref<8x8xf32, #tpu.memory_space<vmem>>, %arg13: memref<8x1xf32, #tpu.memory_space<vmem>>, %arg14: memref<8x2xf32, #tpu.memory_space<vmem>>, %arg15: memref<2x1xf32, #tpu.memory_space<vmem>>, %arg16: memref<2x256xf32, #tpu.memory_space<vmem>>) attributes {dimension_semantics = [#tpu.dimension_semantics<parallel>], iteration_bounds = array<i64: 2>, scalar_prefetch = 0 : i64, scratch_operands = 0 : i64, tpu.core_type = #tpu.core_type<tc>, window_params = [{transform_indices = @transform_0, window_bounds = array<i64: 2, 256>}, {pipeline_mode = #tpu.pipeline_mode<synchronous>, transform_indices = @transform_1, window_bounds = array<i64: 8, 2>}, {pipeline_mode = #tpu.pipeline_mode<synchronous>, transform_indices = @transform_2, window_bounds = array<i64: 8, 1>}, {pipeline_mode = #tpu.pipeline_mode<synchronous>, transform_indices = @transform_3, window_bounds = array<i64: 8, 8>}, {pipeline_mode = #tpu.pipeline_mode<synchronous>, transform_indices = @transform_4, window_bounds = array<i64: 8, 1>}, {pipeline_mode = #tpu.pipeline_mode<synchronous>, transform_indices = @transform_5, window_bounds = array<i64: 16, 8>}, {pipeline_mode = #tpu.pipeline_mode<synchronous>, transform_indices = @transform_6, window_bounds = array<i64: 16, 1>}, {pipeline_mode = #tpu.pipeline_mode<synchronous>, transform_indices = @transform_7, window_bounds = array<i64: 4, 16, 16>}, {pipeline_mode = #tpu.pipeline_mode<synchronous>, transform_indices = @transform_8, window_bounds = array<i64: 4, 16, 1>}, {pipeline_mode = #tpu.pipeline_mode<synchronous>, transform_indices = @transform_9, window_bounds = array<i64: 8, 16>}, {pipeline_mode = #tpu.pipeline_mode<synchronous>, transform_indices = @transform_10, window_bounds = array<i64: 8, 1>}, {pipeline_mode = #tpu.pipeline_mode<synchronous>, transform_indices = @transform_11, window_bounds = array<i64: 8, 8>}, {pipeline_mode = #tpu.pipeline_mode<synchronous>, transform_indices = @transform_12, window_bounds = array<i64: 8, 1>}, {pipeline_mode = #tpu.pipeline_mode<synchronous>, transform_indices = @transform_13, window_bounds = array<i64: 8, 2>}, {pipeline_mode = #tpu.pipeline_mode<synchronous>, transform_indices = @transform_14, window_bounds = array<i64: 2, 1>}, {transform_indices = @transform_15, window_bounds = array<i64: 2, 256>}]} {
    %c0 = arith.constant 0 : index
    %c0_0 = arith.constant 0 : index
    %0 = vector.load %arg1[%c0, %c0_0] : memref<2x256xf32, #tpu.memory_space<vmem>>, vector<2x256xf32>
    %c0_1 = arith.constant 0 : index
    %c0_2 = arith.constant 0 : index
    %1 = vector.load %arg2[%c0_1, %c0_2] : memref<8x2xf32, #tpu.memory_space<vmem>>, vector<8x2xf32>
    %2 = vector.extract_strided_slice %1 {offsets = [0, 0], sizes = [8, 1], strides = [1, 1]} : vector<8x2xf32> to vector<8x1xf32>
    %3 = vector.extract_strided_slice %0 {offsets = [0, 0], sizes = [1, 256], strides = [1, 1]} : vector<2x256xf32> to vector<1x256xf32>
    %4 = vector.broadcast %2 : vector<8x1xf32> to vector<8x256xf32>
    %5 = vector.broadcast %3 : vector<1x256xf32> to vector<8x256xf32>
    %6 = arith.mulf %4, %5 : vector<8x256xf32>
    %7 = vector.extract_strided_slice %1 {offsets = [0, 1], sizes = [8, 1], strides = [1, 1]} : vector<8x2xf32> to vector<8x1xf32>
    %8 = vector.extract_strided_slice %0 {offsets = [1, 0], sizes = [1, 256], strides = [1, 1]} : vector<2x256xf32> to vector<1x256xf32>
    %9 = vector.broadcast %7 : vector<8x1xf32> to vector<8x256xf32>
    %10 = vector.broadcast %8 : vector<1x256xf32> to vector<8x256xf32>
    %11 = arith.mulf %9, %10 : vector<8x256xf32>
    %12 = arith.addf %6, %11 : vector<8x256xf32>
    %c0_3 = arith.constant 0 : index
    %c0_4 = arith.constant 0 : index
    %13 = vector.load %arg3[%c0_3, %c0_4] : memref<8x1xf32, #tpu.memory_space<vmem>>, vector<8x1xf32>
    %14 = vector.broadcast %13 : vector<8x1xf32> to vector<8x256xf32>
    %15 = arith.addf %12, %14 : vector<8x256xf32>
    %cst = arith.constant 0.000000e+00 : f32
    %16 = vector.broadcast %cst : f32 to vector<8x256xf32>
    %17 = arith.cmpf ogt, %15, %16 : vector<8x256xf32>
    %cst_5 = arith.constant 2.000000e-01 : f32
    %18 = vector.broadcast %cst_5 : f32 to vector<8x256xf32>
    %19 = arith.mulf %18, %15 : vector<8x256xf32>
    %20 = arith.select %17, %15, %19 : vector<8x256xi1>, vector<8x256xf32>
    %c0_6 = arith.constant 0 : index
    %c0_7 = arith.constant 0 : index
    %21 = vector.load %arg4[%c0_6, %c0_7] : memref<8x8xf32, #tpu.memory_space<vmem>>, vector<8x8xf32>
    %c0_8 = arith.constant 0 : index
    %c0_9 = arith.constant 0 : index
    %22 = vector.load %arg5[%c0_8, %c0_9] : memref<8x1xf32, #tpu.memory_space<vmem>>, vector<8x1xf32>
    %23 = vector.extract_strided_slice %21 {offsets = [0, 0], sizes = [8, 1], strides = [1, 1]} : vector<8x8xf32> to vector<8x1xf32>
    %24 = vector.extract_strided_slice %20 {offsets = [0, 0], sizes = [1, 256], strides = [1, 1]} : vector<8x256xf32> to vector<1x256xf32>
    %25 = vector.broadcast %23 : vector<8x1xf32> to vector<8x256xf32>
    %26 = vector.broadcast %24 : vector<1x256xf32> to vector<8x256xf32>
    %27 = arith.mulf %25, %26 : vector<8x256xf32>
    %28 = vector.extract_strided_slice %21 {offsets = [0, 1], sizes = [8, 1], strides = [1, 1]} : vector<8x8xf32> to vector<8x1xf32>
    %29 = vector.extract_strided_slice %20 {offsets = [1, 0], sizes = [1, 256], strides = [1, 1]} : vector<8x256xf32> to vector<1x256xf32>
    %30 = vector.broadcast %28 : vector<8x1xf32> to vector<8x256xf32>
    %31 = vector.broadcast %29 : vector<1x256xf32> to vector<8x256xf32>
    %32 = arith.mulf %30, %31 : vector<8x256xf32>
    %33 = arith.addf %27, %32 : vector<8x256xf32>
    %34 = vector.extract_strided_slice %21 {offsets = [0, 2], sizes = [8, 1], strides = [1, 1]} : vector<8x8xf32> to vector<8x1xf32>
    %35 = vector.extract_strided_slice %20 {offsets = [2, 0], sizes = [1, 256], strides = [1, 1]} : vector<8x256xf32> to vector<1x256xf32>
    %36 = vector.broadcast %34 : vector<8x1xf32> to vector<8x256xf32>
    %37 = vector.broadcast %35 : vector<1x256xf32> to vector<8x256xf32>
    %38 = arith.mulf %36, %37 : vector<8x256xf32>
    %39 = arith.addf %33, %38 : vector<8x256xf32>
    %40 = vector.extract_strided_slice %21 {offsets = [0, 3], sizes = [8, 1], strides = [1, 1]} : vector<8x8xf32> to vector<8x1xf32>
    %41 = vector.extract_strided_slice %20 {offsets = [3, 0], sizes = [1, 256], strides = [1, 1]} : vector<8x256xf32> to vector<1x256xf32>
    %42 = vector.broadcast %40 : vector<8x1xf32> to vector<8x256xf32>
    %43 = vector.broadcast %41 : vector<1x256xf32> to vector<8x256xf32>
    %44 = arith.mulf %42, %43 : vector<8x256xf32>
    %45 = arith.addf %39, %44 : vector<8x256xf32>
    %46 = vector.extract_strided_slice %21 {offsets = [0, 4], sizes = [8, 1], strides = [1, 1]} : vector<8x8xf32> to vector<8x1xf32>
    %47 = vector.extract_strided_slice %20 {offsets = [4, 0], sizes = [1, 256], strides = [1, 1]} : vector<8x256xf32> to vector<1x256xf32>
    %48 = vector.broadcast %46 : vector<8x1xf32> to vector<8x256xf32>
    %49 = vector.broadcast %47 : vector<1x256xf32> to vector<8x256xf32>
    %50 = arith.mulf %48, %49 : vector<8x256xf32>
    %51 = arith.addf %45, %50 : vector<8x256xf32>
    %52 = vector.extract_strided_slice %21 {offsets = [0, 5], sizes = [8, 1], strides = [1, 1]} : vector<8x8xf32> to vector<8x1xf32>
    %53 = vector.extract_strided_slice %20 {offsets = [5, 0], sizes = [1, 256], strides = [1, 1]} : vector<8x256xf32> to vector<1x256xf32>
    %54 = vector.broadcast %52 : vector<8x1xf32> to vector<8x256xf32>
    %55 = vector.broadcast %53 : vector<1x256xf32> to vector<8x256xf32>
    %56 = arith.mulf %54, %55 : vector<8x256xf32>
    %57 = arith.addf %51, %56 : vector<8x256xf32>
    %58 = vector.extract_strided_slice %21 {offsets = [0, 6], sizes = [8, 1], strides = [1, 1]} : vector<8x8xf32> to vector<8x1xf32>
    %59 = vector.extract_strided_slice %20 {offsets = [6, 0], sizes = [1, 256], strides = [1, 1]} : vector<8x256xf32> to vector<1x256xf32>
    %60 = vector.broadcast %58 : vector<8x1xf32> to vector<8x256xf32>
    %61 = vector.broadcast %59 : vector<1x256xf32> to vector<8x256xf32>
    %62 = arith.mulf %60, %61 : vector<8x256xf32>
    %63 = arith.addf %57, %62 : vector<8x256xf32>
    %64 = vector.extract_strided_slice %21 {offsets = [0, 7], sizes = [8, 1], strides = [1, 1]} : vector<8x8xf32> to vector<8x1xf32>
    %65 = vector.extract_strided_slice %20 {offsets = [7, 0], sizes = [1, 256], strides = [1, 1]} : vector<8x256xf32> to vector<1x256xf32>
    %66 = vector.broadcast %64 : vector<8x1xf32> to vector<8x256xf32>
    %67 = vector.broadcast %65 : vector<1x256xf32> to vector<8x256xf32>
    %68 = arith.mulf %66, %67 : vector<8x256xf32>
    %69 = arith.addf %63, %68 : vector<8x256xf32>
    %70 = vector.broadcast %22 : vector<8x1xf32> to vector<8x256xf32>
    %71 = arith.addf %69, %70 : vector<8x256xf32>
    %cst_10 = arith.constant 0.000000e+00 : f32
    %72 = vector.broadcast %cst_10 : f32 to vector<8x256xf32>
    %73 = arith.cmpf ogt, %71, %72 : vector<8x256xf32>
    %cst_11 = arith.constant 2.000000e-01 : f32
    %74 = vector.broadcast %cst_11 : f32 to vector<8x256xf32>
    %75 = arith.mulf %74, %71 : vector<8x256xf32>
    %76 = arith.select %73, %71, %75 : vector<8x256xi1>, vector<8x256xf32>
    %c0_12 = arith.constant 0 : index
    %c0_13 = arith.constant 0 : index
    %77 = vector.load %arg6[%c0_12, %c0_13] : memref<16x8xf32, #tpu.memory_space<vmem>>, vector<16x8xf32>
    %c0_14 = arith.constant 0 : index
    %c0_15 = arith.constant 0 : index
    %78 = vector.load %arg7[%c0_14, %c0_15] : memref<16x1xf32, #tpu.memory_space<vmem>>, vector<16x1xf32>
    %cst_16 = arith.constant dense<0.000000e+00> : vector<16x256xf32>
    %79 = tpu.matmul %77, %76, %cst_16 {dimension_numbers = #tpu.dot_dimension_numbers<[1], [0], [0], [1], [0, 0, 1, 1], [], []>} : vector<16x8xf32>, vector<8x256xf32>, vector<16x256xf32> -> vector<16x256xf32>
    %80 = vector.broadcast %78 : vector<16x1xf32> to vector<16x256xf32>
    %81 = arith.addf %79, %80 : vector<16x256xf32>
    %cst_17 = arith.constant 0.000000e+00 : f32
    %82 = vector.broadcast %cst_17 : f32 to vector<16x256xf32>
    %83 = arith.cmpf ogt, %81, %82 : vector<16x256xf32>
    %cst_18 = arith.constant 2.000000e-01 : f32
    %84 = vector.broadcast %cst_18 : f32 to vector<16x256xf32>
    %85 = arith.mulf %84, %81 : vector<16x256xf32>
    %86 = arith.select %83, %81, %85 : vector<16x256xi1>, vector<16x256xf32>
    %c0_19 = arith.constant 0 : index
    %c0_20 = arith.constant 0 : index
    %c0_21 = arith.constant 0 : index
    %87 = vector.load %arg8[%c0_19, %c0_20, %c0_21] : memref<4x16x16xf32, #tpu.memory_space<vmem>>, vector<1x16x16xf32>
    %88 = vector.shape_cast %87 : vector<1x16x16xf32> to vector<16x16xf32>
    %c0_22 = arith.constant 0 : index
    %c0_23 = arith.constant 0 : index
    %c0_24 = arith.constant 0 : index
    %89 = vector.load %arg9[%c0_22, %c0_23, %c0_24] : memref<4x16x1xf32, #tpu.memory_space<vmem>>, vector<1x16x1xf32>
    %90 = vector.shape_cast %89 : vector<1x16x1xf32> to vector<16x1xf32>
    %cst_25 = arith.constant dense<0.000000e+00> : vector<16x256xf32>
    %91 = tpu.matmul %88, %86, %cst_25 {dimension_numbers = #tpu.dot_dimension_numbers<[1], [0], [0], [1], [0, 0, 1, 1], [], []>} : vector<16x16xf32>, vector<16x256xf32>, vector<16x256xf32> -> vector<16x256xf32>
    %92 = vector.broadcast %90 : vector<16x1xf32> to vector<16x256xf32>
    %93 = arith.addf %91, %92 : vector<16x256xf32>
    %cst_26 = arith.constant 0.000000e+00 : f32
    %94 = vector.broadcast %cst_26 : f32 to vector<16x256xf32>
    %95 = arith.cmpf ogt, %93, %94 : vector<16x256xf32>
    %cst_27 = arith.constant 2.000000e-01 : f32
    %96 = vector.broadcast %cst_27 : f32 to vector<16x256xf32>
    %97 = arith.mulf %96, %93 : vector<16x256xf32>
    %98 = arith.select %95, %93, %97 : vector<16x256xi1>, vector<16x256xf32>
    %c1 = arith.constant 1 : index
    %c0_28 = arith.constant 0 : index
    %c0_29 = arith.constant 0 : index
    %99 = vector.load %arg8[%c1, %c0_28, %c0_29] : memref<4x16x16xf32, #tpu.memory_space<vmem>>, vector<1x16x16xf32>
    %100 = vector.shape_cast %99 : vector<1x16x16xf32> to vector<16x16xf32>
    %c1_30 = arith.constant 1 : index
    %c0_31 = arith.constant 0 : index
    %c0_32 = arith.constant 0 : index
    %101 = vector.load %arg9[%c1_30, %c0_31, %c0_32] : memref<4x16x1xf32, #tpu.memory_space<vmem>>, vector<1x16x1xf32>
    %102 = vector.shape_cast %101 : vector<1x16x1xf32> to vector<16x1xf32>
    %cst_33 = arith.constant dense<0.000000e+00> : vector<16x256xf32>
    %103 = tpu.matmul %100, %98, %cst_33 {dimension_numbers = #tpu.dot_dimension_numbers<[1], [0], [0], [1], [0, 0, 1, 1], [], []>} : vector<16x16xf32>, vector<16x256xf32>, vector<16x256xf32> -> vector<16x256xf32>
    %104 = vector.broadcast %102 : vector<16x1xf32> to vector<16x256xf32>
    %105 = arith.addf %103, %104 : vector<16x256xf32>
    %cst_34 = arith.constant 0.000000e+00 : f32
    %106 = vector.broadcast %cst_34 : f32 to vector<16x256xf32>
    %107 = arith.maximumf %105, %106 : vector<16x256xf32>
    %c2 = arith.constant 2 : index
    %c0_35 = arith.constant 0 : index
    %c0_36 = arith.constant 0 : index
    %108 = vector.load %arg8[%c2, %c0_35, %c0_36] : memref<4x16x16xf32, #tpu.memory_space<vmem>>, vector<1x16x16xf32>
    %109 = vector.shape_cast %108 : vector<1x16x16xf32> to vector<16x16xf32>
    %c2_37 = arith.constant 2 : index
    %c0_38 = arith.constant 0 : index
    %c0_39 = arith.constant 0 : index
    %110 = vector.load %arg9[%c2_37, %c0_38, %c0_39] : memref<4x16x1xf32, #tpu.memory_space<vmem>>, vector<1x16x1xf32>
    %111 = vector.shape_cast %110 : vector<1x16x1xf32> to vector<16x1xf32>
    %cst_40 = arith.constant dense<0.000000e+00> : vector<16x256xf32>
    %112 = tpu.matmul %109, %107, %cst_40 {dimension_numbers = #tpu.dot_dimension_numbers<[1], [0], [0], [1], [0, 0, 1, 1], [], []>} : vector<16x16xf32>, vector<16x256xf32>, vector<16x256xf32> -> vector<16x256xf32>
    %113 = vector.broadcast %111 : vector<16x1xf32> to vector<16x256xf32>
    %114 = arith.addf %112, %113 : vector<16x256xf32>
    %cst_41 = arith.constant 0.000000e+00 : f32
    %115 = vector.broadcast %cst_41 : f32 to vector<16x256xf32>
    %116 = arith.maximumf %114, %115 : vector<16x256xf32>
    %c3 = arith.constant 3 : index
    %c0_42 = arith.constant 0 : index
    %c0_43 = arith.constant 0 : index
    %117 = vector.load %arg8[%c3, %c0_42, %c0_43] : memref<4x16x16xf32, #tpu.memory_space<vmem>>, vector<1x16x16xf32>
    %118 = vector.shape_cast %117 : vector<1x16x16xf32> to vector<16x16xf32>
    %c3_44 = arith.constant 3 : index
    %c0_45 = arith.constant 0 : index
    %c0_46 = arith.constant 0 : index
    %119 = vector.load %arg9[%c3_44, %c0_45, %c0_46] : memref<4x16x1xf32, #tpu.memory_space<vmem>>, vector<1x16x1xf32>
    %120 = vector.shape_cast %119 : vector<1x16x1xf32> to vector<16x1xf32>
    %cst_47 = arith.constant dense<0.000000e+00> : vector<16x256xf32>
    %121 = tpu.matmul %118, %116, %cst_47 {dimension_numbers = #tpu.dot_dimension_numbers<[1], [0], [0], [1], [0, 0, 1, 1], [], []>} : vector<16x16xf32>, vector<16x256xf32>, vector<16x256xf32> -> vector<16x256xf32>
    %122 = vector.broadcast %120 : vector<16x1xf32> to vector<16x256xf32>
    %123 = arith.addf %121, %122 : vector<16x256xf32>
    %cst_48 = arith.constant 0.000000e+00 : f32
    %124 = vector.broadcast %cst_48 : f32 to vector<16x256xf32>
    %125 = arith.maximumf %123, %124 : vector<16x256xf32>
    %c0_49 = arith.constant 0 : index
    %c0_50 = arith.constant 0 : index
    %126 = vector.load %arg10[%c0_49, %c0_50] : memref<8x16xf32, #tpu.memory_space<vmem>>, vector<8x16xf32>
    %c0_51 = arith.constant 0 : index
    %c0_52 = arith.constant 0 : index
    %127 = vector.load %arg11[%c0_51, %c0_52] : memref<8x1xf32, #tpu.memory_space<vmem>>, vector<8x1xf32>
    %cst_53 = arith.constant dense<0.000000e+00> : vector<8x256xf32>
    %128 = tpu.matmul %126, %125, %cst_53 {dimension_numbers = #tpu.dot_dimension_numbers<[1], [0], [0], [1], [0, 0, 1, 1], [], []>} : vector<8x16xf32>, vector<16x256xf32>, vector<8x256xf32> -> vector<8x256xf32>
    %129 = vector.broadcast %127 : vector<8x1xf32> to vector<8x256xf32>
    %130 = arith.addf %128, %129 : vector<8x256xf32>
    %cst_54 = arith.constant 0.000000e+00 : f32
    %131 = vector.broadcast %cst_54 : f32 to vector<8x256xf32>
    %132 = arith.maximumf %130, %131 : vector<8x256xf32>
    %c0_55 = arith.constant 0 : index
    %c0_56 = arith.constant 0 : index
    %133 = vector.load %arg12[%c0_55, %c0_56] : memref<8x8xf32, #tpu.memory_space<vmem>>, vector<8x8xf32>
    %c0_57 = arith.constant 0 : index
    %c0_58 = arith.constant 0 : index
    %134 = vector.load %arg13[%c0_57, %c0_58] : memref<8x1xf32, #tpu.memory_space<vmem>>, vector<8x1xf32>
    %135 = vector.extract_strided_slice %133 {offsets = [0, 0], sizes = [8, 1], strides = [1, 1]} : vector<8x8xf32> to vector<8x1xf32>
    %136 = vector.extract_strided_slice %132 {offsets = [0, 0], sizes = [1, 256], strides = [1, 1]} : vector<8x256xf32> to vector<1x256xf32>
    %137 = vector.broadcast %135 : vector<8x1xf32> to vector<8x256xf32>
    %138 = vector.broadcast %136 : vector<1x256xf32> to vector<8x256xf32>
    %139 = arith.mulf %137, %138 : vector<8x256xf32>
    %140 = vector.extract_strided_slice %133 {offsets = [0, 1], sizes = [8, 1], strides = [1, 1]} : vector<8x8xf32> to vector<8x1xf32>
    %141 = vector.extract_strided_slice %132 {offsets = [1, 0], sizes = [1, 256], strides = [1, 1]} : vector<8x256xf32> to vector<1x256xf32>
    %142 = vector.broadcast %140 : vector<8x1xf32> to vector<8x256xf32>
    %143 = vector.broadcast %141 : vector<1x256xf32> to vector<8x256xf32>
    %144 = arith.mulf %142, %143 : vector<8x256xf32>
    %145 = arith.addf %139, %144 : vector<8x256xf32>
    %146 = vector.extract_strided_slice %133 {offsets = [0, 2], sizes = [8, 1], strides = [1, 1]} : vector<8x8xf32> to vector<8x1xf32>
    %147 = vector.extract_strided_slice %132 {offsets = [2, 0], sizes = [1, 256], strides = [1, 1]} : vector<8x256xf32> to vector<1x256xf32>
    %148 = vector.broadcast %146 : vector<8x1xf32> to vector<8x256xf32>
    %149 = vector.broadcast %147 : vector<1x256xf32> to vector<8x256xf32>
    %150 = arith.mulf %148, %149 : vector<8x256xf32>
    %151 = arith.addf %145, %150 : vector<8x256xf32>
    %152 = vector.extract_strided_slice %133 {offsets = [0, 3], sizes = [8, 1], strides = [1, 1]} : vector<8x8xf32> to vector<8x1xf32>
    %153 = vector.extract_strided_slice %132 {offsets = [3, 0], sizes = [1, 256], strides = [1, 1]} : vector<8x256xf32> to vector<1x256xf32>
    %154 = vector.broadcast %152 : vector<8x1xf32> to vector<8x256xf32>
    %155 = vector.broadcast %153 : vector<1x256xf32> to vector<8x256xf32>
    %156 = arith.mulf %154, %155 : vector<8x256xf32>
    %157 = arith.addf %151, %156 : vector<8x256xf32>
    %158 = vector.extract_strided_slice %133 {offsets = [0, 4], sizes = [8, 1], strides = [1, 1]} : vector<8x8xf32> to vector<8x1xf32>
    %159 = vector.extract_strided_slice %132 {offsets = [4, 0], sizes = [1, 256], strides = [1, 1]} : vector<8x256xf32> to vector<1x256xf32>
    %160 = vector.broadcast %158 : vector<8x1xf32> to vector<8x256xf32>
    %161 = vector.broadcast %159 : vector<1x256xf32> to vector<8x256xf32>
    %162 = arith.mulf %160, %161 : vector<8x256xf32>
    %163 = arith.addf %157, %162 : vector<8x256xf32>
    %164 = vector.extract_strided_slice %133 {offsets = [0, 5], sizes = [8, 1], strides = [1, 1]} : vector<8x8xf32> to vector<8x1xf32>
    %165 = vector.extract_strided_slice %132 {offsets = [5, 0], sizes = [1, 256], strides = [1, 1]} : vector<8x256xf32> to vector<1x256xf32>
    %166 = vector.broadcast %164 : vector<8x1xf32> to vector<8x256xf32>
    %167 = vector.broadcast %165 : vector<1x256xf32> to vector<8x256xf32>
    %168 = arith.mulf %166, %167 : vector<8x256xf32>
    %169 = arith.addf %163, %168 : vector<8x256xf32>
    %170 = vector.extract_strided_slice %133 {offsets = [0, 6], sizes = [8, 1], strides = [1, 1]} : vector<8x8xf32> to vector<8x1xf32>
    %171 = vector.extract_strided_slice %132 {offsets = [6, 0], sizes = [1, 256], strides = [1, 1]} : vector<8x256xf32> to vector<1x256xf32>
    %172 = vector.broadcast %170 : vector<8x1xf32> to vector<8x256xf32>
    %173 = vector.broadcast %171 : vector<1x256xf32> to vector<8x256xf32>
    %174 = arith.mulf %172, %173 : vector<8x256xf32>
    %175 = arith.addf %169, %174 : vector<8x256xf32>
    %176 = vector.extract_strided_slice %133 {offsets = [0, 7], sizes = [8, 1], strides = [1, 1]} : vector<8x8xf32> to vector<8x1xf32>
    %177 = vector.extract_strided_slice %132 {offsets = [7, 0], sizes = [1, 256], strides = [1, 1]} : vector<8x256xf32> to vector<1x256xf32>
    %178 = vector.broadcast %176 : vector<8x1xf32> to vector<8x256xf32>
    %179 = vector.broadcast %177 : vector<1x256xf32> to vector<8x256xf32>
    %180 = arith.mulf %178, %179 : vector<8x256xf32>
    %181 = arith.addf %175, %180 : vector<8x256xf32>
    %182 = vector.broadcast %134 : vector<8x1xf32> to vector<8x256xf32>
    %183 = arith.addf %181, %182 : vector<8x256xf32>
    %cst_59 = arith.constant 0.000000e+00 : f32
    %184 = vector.broadcast %cst_59 : f32 to vector<8x256xf32>
    %185 = arith.maximumf %183, %184 : vector<8x256xf32>
    %c0_60 = arith.constant 0 : index
    %c0_61 = arith.constant 0 : index
    %186 = vector.load %arg14[%c0_60, %c0_61] : memref<8x2xf32, #tpu.memory_space<vmem>>, vector<8x2xf32>
    %187 = vector.extract_strided_slice %186 {offsets = [0, 0], sizes = [8, 1], strides = [1, 1]} : vector<8x2xf32> to vector<8x1xf32>
    %188 = vector.broadcast %187 : vector<8x1xf32> to vector<8x256xf32>
    %189 = arith.mulf %188, %185 : vector<8x256xf32>
    %cst_62 = arith.constant dense<0.000000e+00> : vector<256xf32>
    %190 = vector.multi_reduction <add>, %189, %cst_62 [0] : vector<8x256xf32> to vector<256xf32>
    %191 = vector.shape_cast %190 : vector<256xf32> to vector<1x256xf32>
    %192 = vector.extract_strided_slice %186 {offsets = [0, 1], sizes = [8, 1], strides = [1, 1]} : vector<8x2xf32> to vector<8x1xf32>
    %193 = vector.broadcast %192 : vector<8x1xf32> to vector<8x256xf32>
    %194 = arith.mulf %193, %185 : vector<8x256xf32>
    %cst_63 = arith.constant dense<0.000000e+00> : vector<256xf32>
    %195 = vector.multi_reduction <add>, %194, %cst_63 [0] : vector<8x256xf32> to vector<256xf32>
    %196 = vector.shape_cast %195 : vector<256xf32> to vector<1x256xf32>
    %c0_64 = arith.constant 0 : index
    %c0_65 = arith.constant 0 : index
    %197 = vector.load %arg15[%c0_64, %c0_65] : memref<2x1xf32, #tpu.memory_space<vmem>>, vector<1x1xf32>
    %198 = vector.broadcast %197 : vector<1x1xf32> to vector<1x256xf32>
    %199 = arith.addf %191, %198 : vector<1x256xf32>
    %200 = arith.negf %199 : vector<1x256xf32>
    %201 = math.exp %200 : vector<1x256xf32>
    %cst_66 = arith.constant 1.000000e+00 : f32
    %202 = vector.broadcast %cst_66 : f32 to vector<1x256xf32>
    %203 = arith.addf %202, %201 : vector<1x256xf32>
    %204 = arith.divf %202, %203 : vector<1x256xf32>
    %c0_67 = arith.constant 0 : index
    %c0_68 = arith.constant 0 : index
    %205 = vector.load %arg16[%c0_67, %c0_68] : memref<2x256xf32, #tpu.memory_space<vmem>>, vector<1x256xf32>
    tpu.vector_store %arg16[%c0_67, %c0_68], %204 {strides = array<i32>} : memref<2x256xf32, #tpu.memory_space<vmem>>, vector<1x256xf32>,
    %c1_69 = arith.constant 1 : index
    %c0_70 = arith.constant 0 : index
    %206 = vector.load %arg15[%c1_69, %c0_70] : memref<2x1xf32, #tpu.memory_space<vmem>>, vector<1x1xf32>
    %207 = vector.broadcast %206 : vector<1x1xf32> to vector<1x256xf32>
    %208 = arith.addf %196, %207 : vector<1x256xf32>
    %209 = arith.negf %208 : vector<1x256xf32>
    %210 = math.exp %209 : vector<1x256xf32>
    %cst_71 = arith.constant 1.000000e+00 : f32
    %211 = vector.broadcast %cst_71 : f32 to vector<1x256xf32>
    %212 = arith.addf %211, %210 : vector<1x256xf32>
    %213 = arith.divf %211, %212 : vector<1x256xf32>
    %c1_72 = arith.constant 1 : index
    %c0_73 = arith.constant 0 : index
    %214 = vector.load %arg16[%c1_72, %c0_73] : memref<2x256xf32, #tpu.memory_space<vmem>>, vector<1x256xf32>
    tpu.vector_store %arg16[%c1_72, %c0_73], %213 {strides = array<i32>} : memref<2x256xf32, #tpu.memory_space<vmem>>, vector<1x256xf32>,
    return
  }
  func.func @transform_0(%arg0: i32) -> (i32, i32) {
    %c0_i32 = arith.constant 0 : i32
    %c0_i32_0 = arith.constant 0 : i32
    return %c0_i32, %arg0 : i32, i32
  }
  func.func @transform_1(%arg0: i32) -> (i32, i32) {
    %c0_i32 = arith.constant 0 : i32
    %c0_i32_0 = arith.constant 0 : i32
    %c0_i32_1 = arith.constant 0 : i32
    return %c0_i32, %c0_i32_0 : i32, i32
  }
  func.func @transform_2(%arg0: i32) -> (i32, i32) {
    %c0_i32 = arith.constant 0 : i32
    %c0_i32_0 = arith.constant 0 : i32
    %c0_i32_1 = arith.constant 0 : i32
    return %c0_i32, %c0_i32_0 : i32, i32
  }
  func.func @transform_3(%arg0: i32) -> (i32, i32) {
    %c0_i32 = arith.constant 0 : i32
    %c0_i32_0 = arith.constant 0 : i32
    %c0_i32_1 = arith.constant 0 : i32
    return %c0_i32, %c0_i32_0 : i32, i32
  }
  func.func @transform_4(%arg0: i32) -> (i32, i32) {
    %c0_i32 = arith.constant 0 : i32
    %c0_i32_0 = arith.constant 0 : i32
    %c0_i32_1 = arith.constant 0 : i32
    return %c0_i32, %c0_i32_0 : i32, i32
  }
  func.func @transform_5(%arg0: i32) -> (i32, i32) {
    %c0_i32 = arith.constant 0 : i32
    %c0_i32_0 = arith.constant 0 : i32
    %c0_i32_1 = arith.constant 0 : i32
    return %c0_i32, %c0_i32_0 : i32, i32
  }
  func.func @transform_6(%arg0: i32) -> (i32, i32) {
    %c0_i32 = arith.constant 0 : i32
    %c0_i32_0 = arith.constant 0 : i32
    %c0_i32_1 = arith.constant 0 : i32
    return %c0_i32, %c0_i32_0 : i32, i32
  }
  func.func @transform_7(%arg0: i32) -> (i32, i32, i32) {
    %c0_i32 = arith.constant 0 : i32
    %c0_i32_0 = arith.constant 0 : i32
    %c0_i32_1 = arith.constant 0 : i32
    %c0_i32_2 = arith.constant 0 : i32
    return %c0_i32, %c0_i32_0, %c0_i32_1 : i32, i32, i32
  }
  func.func @transform_8(%arg0: i32) -> (i32, i32, i32) {
    %c0_i32 = arith.constant 0 : i32
    %c0_i32_0 = arith.constant 0 : i32
    %c0_i32_1 = arith.constant 0 : i32
    %c0_i32_2 = arith.constant 0 : i32
    return %c0_i32, %c0_i32_0, %c0_i32_1 : i32, i32, i32
  }
  func.func @transform_9(%arg0: i32) -> (i32, i32) {
    %c0_i32 = arith.constant 0 : i32
    %c0_i32_0 = arith.constant 0 : i32
    %c0_i32_1 = arith.constant 0 : i32
    return %c0_i32, %c0_i32_0 : i32, i32
  }
  func.func @transform_10(%arg0: i32) -> (i32, i32) {
    %c0_i32 = arith.constant 0 : i32
    %c0_i32_0 = arith.constant 0 : i32
    %c0_i32_1 = arith.constant 0 : i32
    return %c0_i32, %c0_i32_0 : i32, i32
  }
  func.func @transform_11(%arg0: i32) -> (i32, i32) {
    %c0_i32 = arith.constant 0 : i32
    %c0_i32_0 = arith.constant 0 : i32
    %c0_i32_1 = arith.constant 0 : i32
    return %c0_i32, %c0_i32_0 : i32, i32
  }
  func.func @transform_12(%arg0: i32) -> (i32, i32) {
    %c0_i32 = arith.constant 0 : i32
    %c0_i32_0 = arith.constant 0 : i32
    %c0_i32_1 = arith.constant 0 : i32
    return %c0_i32, %c0_i32_0 : i32, i32
  }
  func.func @transform_13(%arg0: i32) -> (i32, i32) {
    %c0_i32 = arith.constant 0 : i32
    %c0_i32_0 = arith.constant 0 : i32
    %c0_i32_1 = arith.constant 0 : i32
    return %c0_i32, %c0_i32_0 : i32, i32
  }
  func.func @transform_14(%arg0: i32) -> (i32, i32) {
    %c0_i32 = arith.constant 0 : i32
    %c0_i32_0 = arith.constant 0 : i32
    %c0_i32_1 = arith.constant 0 : i32
    return %c0_i32, %c0_i32_0 : i32, i32
  }
  func.func @transform_15(%arg0: i32) -> (i32, i32) {
    %c0_i32 = arith.constant 0 : i32
    %c0_i32_0 = arith.constant 0 : i32
    return %c0_i32, %arg0 : i32, i32
  }
}

</mosaic_0001>

<llo_original>
// kernel: ae_cnn_forward.1
$region0: #{ae_cnn_forward.1}
  #allocation0 [shape = 'u32[]', space=smem, size = 0x4, offset = 0x4, fixed_abs, tag = 'smem constant byte address 0x4 - core index']
  #allocation1 [shape = 'u32[144,128]{1,0:T(1,128)}', space=vmem, size = 0x12000, scoped, tag = 'internal scratch']
  %s0 = inlined_call_operand.vmem [shape: f32[2,512], index: 0, kind: input, shape index: {}]
  %s1 = inlined_call_operand.vmem [shape: f32[8,2], index: 1, kind: input, shape index: {}]
  %s2 = inlined_call_operand.vmem [shape: f32[8,1], index: 2, kind: input, shape index: {}]
  %s3 = inlined_call_operand.vmem [shape: f32[8,8], index: 3, kind: input, shape index: {}]
  %s4 = inlined_call_operand.vmem [shape: f32[8,1], index: 4, kind: input, shape index: {}]
  %s5 = inlined_call_operand.vmem [shape: f32[16,8], index: 5, kind: input, shape index: {}]
  %s6 = inlined_call_operand.vmem [shape: f32[16,1], index: 6, kind: input, shape index: {}]
  %s7 = inlined_call_operand.vmem [shape: f32[4,16,16], index: 7, kind: input, shape index: {}]
  %s8 = inlined_call_operand.vmem [shape: f32[4,16,1], index: 8, kind: input, shape index: {}]
  %s9 = inlined_call_operand.vmem [shape: f32[8,16], index: 9, kind: input, shape index: {}]
  %s10 = inlined_call_operand.vmem [shape: f32[8,1], index: 10, kind: input, shape index: {}]
  %s11 = inlined_call_operand.vmem [shape: f32[8,8], index: 11, kind: input, shape index: {}]
  %s12 = inlined_call_operand.vmem [shape: f32[8,1], index: 12, kind: input, shape index: {}]
  %s13 = inlined_call_operand.vmem [shape: f32[8,2], index: 13, kind: input, shape index: {}]
  %s14 = inlined_call_operand.vmem [shape: f32[2,1], index: 14, kind: input, shape index: {}]
  %s15 = inlined_call_operand.vmem [shape: f32[2,512], index: 15, kind: output, shape index: {}]
  %s16 = sld [smem:[#allocation0]]
  $region93: #{ae_cnn_forward.1} parent=0
    _
  %s18 = ssub.s32 1, %s16
  %s19 = scalar_select 0, %s18, %s16
  loop: start=0, step=1, limit=4
  $region2: #{ae_cnn_forward.1} parent=0 // loop_pre_header
    _
  $region3: #{ae_cnn_forward.1} parent=0 // loop_header
    %s21 = sphi 0, %s25
    %p22 = scmp.ge.s32.totalorder %s21, 4
    %s31 = sphi 0, %s33
    %s34 = sphi 0, %s31
    %s35 = sphi 0, %s34
    %s51 = sphi 0, %s35
    %s55 = sphi 0, %s55
    %s57 = sphi 0, %s55
    %s58 = sphi 0, %s57
    %s72 = sphi 0, %s58
    %s76 = sphi 0, %s76
    %s78 = sphi 0, %s76
    %s79 = sphi 0, %s78
    %s93 = sphi 0, %s79
    %s97 = sphi 0, %s97
    %s99 = sphi 0, %s97
    %s100 = sphi 0, %s99
    %s114 = sphi 0, %s100
    %s118 = sphi 0, %s118
    %s120 = sphi 0, %s118
    %s121 = sphi 0, %s120
    %s135 = sphi 0, %s121
    %s139 = sphi 0, %s139
    %s141 = sphi 0, %s139
    %s142 = sphi 0, %s141
    %s156 = sphi 0, %s142
    %s160 = sphi 0, %s160
    %s162 = sphi 0, %s160
    %s163 = sphi 0, %s162
    %s177 = sphi 0, %s163
    %s181 = sphi 0, %s181
    %s183 = sphi 0, %s181
    %s184 = sphi 0, %s183
    %s198 = sphi 0, %s184
    %s202 = sphi 0, %s202
    %s204 = sphi 0, %s202
    %s205 = sphi 0, %s204
    %s219 = sphi 0, %s205
    %s223 = sphi 0, %s223
    %s225 = sphi 0, %s223
    %s226 = sphi 0, %s225
    %s240 = sphi 0, %s226
    %s244 = sphi 0, %s244
    %s246 = sphi 0, %s244
    %s247 = sphi 0, %s246
    %s261 = sphi 0, %s247
    %s265 = sphi 0, %s265
    %s267 = sphi 0, %s265
    %s268 = sphi 0, %s267
    %s282 = sphi 0, %s268
    %s286 = sphi 0, %s286
    %s288 = sphi 0, %s286
    %s289 = sphi 0, %s288
    %s303 = sphi 0, %s289
    %s307 = sphi 0, %s307
    %s309 = sphi 0, %s307
    %s310 = sphi 0, %s309
    %s324 = sphi 0, %s310
    %s328 = sphi 0, %s328
    %s330 = sphi 0, %s328
    %s331 = sphi 0, %s330
    %s345 = sphi 0, %s331
    %s351 = sphi 0, %s353
    %s354 = sphi 0, %s351
    %s355 = sphi 0, %s354
    %s371 = sphi 0, %s355
  $region4: #{ae_cnn_forward.1} parent=0 // loop_header_branch
    %24 = sbr.rel (%p22) target = $region8
  $region5: #{ae_cnn_forward.1} parent=0 // loop_body
    %s26 = ssub.s32 %s21, 1
    %s27 = ssub.s32 %s21, 2
    %s28 = sadd.s32 %s21, 1
    %s29 = ssub.s32 %s21, %s28
    %p30 = scmp.eq.s32.totalorder %s29, 0
    %s32 = sadd.s32 %s31, 1
    %s33 = scalar_select %p30, %s31, %s32
    %p36 = pneg %p30
    %p37 = scmp.eq.s32.totalorder %s21, 1
    %p38 = por %p36, %p37
    %p39 = scmp.ne.s32.totalorder %s31, %s34
    %p40 = scmp.eq.s32.totalorder %s21, 0
    %p41 = por %p39, %p40
    %p42 = scmp.ne.s32.totalorder %s31, %s34
    %p43 = scmp.eq.s32.totalorder %s26, 1
    %p44 = por %p42, %p43
    %p45 = scmp.ne.s32.totalorder %s34, %s35
    %p46 = scmp.eq.s32.totalorder %s26, 0
    %p47 = por %p45, %p46
    %p48 = scmp.ne.s32.totalorder %s34, %s35
    %p49 = scmp.eq.s32.totalorder %s27, 1
    %p50 = por %p48, %p49
    %p52 = scmp.ne.s32.totalorder %s35, %s51
    %p53 = scmp.eq.s32.totalorder %s27, 0
    %p54 = por %p52, %p53
    %s56 = sadd.s32 %s55, 1
    %p59 = scmp.eq.s32.totalorder %s21, 1
    %p60 = scmp.ne.s32.totalorder %s55, %s57
    %p61 = scmp.eq.s32.totalorder %s21, 0
    %p62 = por %p60, %p61
    %p63 = scmp.ne.s32.totalorder %s55, %s57
    %p64 = scmp.eq.s32.totalorder %s26, 1
    %p65 = por %p63, %p64
    %p66 = scmp.ne.s32.totalorder %s57, %s58
    %p67 = scmp.eq.s32.totalorder %s26, 0
    %p68 = por %p66, %p67
    %p69 = scmp.ne.s32.totalorder %s57, %s58
    %p70 = scmp.eq.s32.totalorder %s27, 1
    %p71 = por %p69, %p70
    %p73 = scmp.ne.s32.totalorder %s58, %s72
    %p74 = scmp.eq.s32.totalorder %s27, 0
    %p75 = por %p73, %p74
    %s77 = sadd.s32 %s76, 1
    %p80 = scmp.eq.s32.totalorder %s21, 1
    %p81 = scmp.ne.s32.totalorder %s76, %s78
    %p82 = scmp.eq.s32.totalorder %s21, 0
    %p83 = por %p81, %p82
    %p84 = scmp.ne.s32.totalorder %s76, %s78
    %p85 = scmp.eq.s32.totalorder %s26, 1
    %p86 = por %p84, %p85
    %p87 = scmp.ne.s32.totalorder %s78, %s79
    %p88 = scmp.eq.s32.totalorder %s26, 0
    %p89 = por %p87, %p88
    %p90 = scmp.ne.s32.totalorder %s78, %s79
    %p91 = scmp.eq.s32.totalorder %s27, 1
    %p92 = por %p90, %p91
    %p94 = scmp.ne.s32.totalorder %s79, %s93
    %p95 = scmp.eq.s32.totalorder %s27, 0
    %p96 = por %p94, %p95
    %s98 = sadd.s32 %s97, 1
    %p101 = scmp.eq.s32.totalorder %s21, 1
    %p102 = scmp.ne.s32.totalorder %s97, %s99
    %p103 = scmp.eq.s32.totalorder %s21, 0
    %p104 = por %p102, %p103
    %p105 = scmp.ne.s32.totalorder %s97, %s99
    %p106 = scmp.eq.s32.totalorder %s26, 1
    %p107 = por %p105, %p106
    %p108 = scmp.ne.s32.totalorder %s99, %s100
    %p109 = scmp.eq.s32.totalorder %s26, 0
    %p110 = por %p108, %p109
    %p111 = scmp.ne.s32.totalorder %s99, %s100
    %p112 = scmp.eq.s32.totalorder %s27, 1
    %p113 = por %p111, %p112
    %p115 = scmp.ne.s32.totalorder %s100, %s114
    %p116 = scmp.eq.s32.totalorder %s27, 0
    %p117 = por %p115, %p116
    %s119 = sadd.s32 %s118, 1
    %p122 = scmp.eq.s32.totalorder %s21, 1
    %p123 = scmp.ne.s32.totalorder %s118, %s120
    %p124 = scmp.eq.s32.totalorder %s21, 0
    %p125 = por %p123, %p124
    %p126 = scmp.ne.s32.totalorder %s118, %s120
    %p127 = scmp.eq.s32.totalorder %s26, 1
    %p128 = por %p126, %p127
    %p129 = scmp.ne.s32.totalorder %s120, %s121
    %p130 = scmp.eq.s32.totalorder %s26, 0
    %p131 = por %p129, %p130
    %p132 = scmp.ne.s32.totalorder %s120, %s121
    %p133 = scmp.eq.s32.totalorder %s27, 1
    %p134 = por %p132, %p133
    %p136 = scmp.ne.s32.totalorder %s121, %s135
    %p137 = scmp.eq.s32.totalorder %s27, 0
    %p138 = por %p136, %p137
    %s140 = sadd.s32 %s139, 1
    %p143 = scmp.eq.s32.totalorder %s21, 1
    %p144 = scmp.ne.s32.totalorder %s139, %s141
    %p145 = scmp.eq.s32.totalorder %s21, 0
    %p146 = por %p144, %p145
    %p147 = scmp.ne.s32.totalorder %s139, %s141
    %p148 = scmp.eq.s32.totalorder %s26, 1
    %p149 = por %p147, %p148
    %p150 = scmp.ne.s32.totalorder %s141, %s142
    %p151 = scmp.eq.s32.totalorder %s26, 0
    %p152 = por %p150, %p151
    %p153 = scmp.ne.s32.totalorder %s141, %s142
    %p154 = scmp.eq.s32.totalorder %s27, 1
    %p155 = por %p153, %p154
    %p157 = scmp.ne.s32.totalorder %s142, %s156
    %p158 = scmp.eq.s32.totalorder %s27, 0
    %p159 = por %p157, %p158
    %s161 = sadd.s32 %s160, 1
    %p164 = scmp.eq.s32.totalorder %s21, 1
    %p165 = scmp.ne.s32.totalorder %s160, %s162
    %p166 = scmp.eq.s32.totalorder %s21, 0
    %p167 = por %p165, %p166
    %p168 = scmp.ne.s32.totalorder %s160, %s162
    %p169 = scmp.eq.s32.totalorder %s26, 1
    %p170 = por %p168, %p169
    %p171 = scmp.ne.s32.totalorder %s162, %s163
    %p172 = scmp.eq.s32.totalorder %s26, 0
    %p173 = por %p171, %p172
    %p174 = scmp.ne.s32.totalorder %s162, %s163
    %p175 = scmp.eq.s32.totalorder %s27, 1
    %p176 = por %p174, %p175
    %p178 = scmp.ne.s32.totalorder %s163, %s177
    %p179 = scmp.eq.s32.totalorder %s27, 0
    %p180 = por %p178, %p179
    %s182 = sadd.s32 %s181, 1
    %p185 = scmp.eq.s32.totalorder %s21, 1
    %p186 = scmp.ne.s32.totalorder %s181, %s183
    %p187 = scmp.eq.s32.totalorder %s21, 0
    %p188 = por %p186, %p187
    %p189 = scmp.ne.s32.totalorder %s181, %s183
    %p190 = scmp.eq.s32.totalorder %s26, 1
    %p191 = por %p189, %p190
    %p192 = scmp.ne.s32.totalorder %s183, %s184
    %p193 = scmp.eq.s32.totalorder %s26, 0
    %p194 = por %p192, %p193
    %p195 = scmp.ne.s32.totalorder %s183, %s184
    %p196 = scmp.eq.s32.totalorder %s27, 1
    %p197 = por %p195, %p196
    %p199 = scmp.ne.s32.totalorder %s184, %s198
    %p200 = scmp.eq.s32.totalorder %s27, 0
    %p201 = por %p199, %p200
    %s203 = sadd.s32 %s202, 1
    %p206 = scmp.eq.s32.totalorder %s21, 1
    %p207 = scmp.ne.s32.totalorder %s202, %s204
    %p208 = scmp.eq.s32.totalorder %s21, 0
    %p209 = por %p207, %p208
    %p210 = scmp.ne.s32.totalorder %s202, %s204
    %p211 = scmp.eq.s32.totalorder %s26, 1
    %p212 = por %p210, %p211
    %p213 = scmp.ne.s32.totalorder %s204, %s205
    %p214 = scmp.eq.s32.totalorder %s26, 0
    %p215 = por %p213, %p214
    %p216 = scmp.ne.s32.totalorder %s204, %s205
    %p217 = scmp.eq.s32.totalorder %s27, 1
    %p218 = por %p216, %p217
    %p220 = scmp.ne.s32.totalorder %s205, %s219
    %p221 = scmp.eq.s32.totalorder %s27, 0
    %p222 = por %p220, %p221
    %s224 = sadd.s32 %s223, 1
    %p227 = scmp.eq.s32.totalorder %s21, 1
    %p228 = scmp.ne.s32.totalorder %s223, %s225
    %p229 = scmp.eq.s32.totalorder %s21, 0
    %p230 = por %p228, %p229
    %p231 = scmp.ne.s32.totalorder %s223, %s225
    %p232 = scmp.eq.s32.totalorder %s26, 1
    %p233 = por %p231, %p232
    %p234 = scmp.ne.s32.totalorder %s225, %s226
    %p235 = scmp.eq.s32.totalorder %s26, 0
    %p236 = por %p234, %p235
    %p237 = scmp.ne.s32.totalorder %s225, %s226
    %p238 = scmp.eq.s32.totalorder %s27, 1
    %p239 = por %p237, %p238
    %p241 = scmp.ne.s32.totalorder %s226, %s240
    %p242 = scmp.eq.s32.totalorder %s27, 0
    %p243 = por %p241, %p242
    %s245 = sadd.s32 %s244, 1
    %p248 = scmp.eq.s32.totalorder %s21, 1
    %p249 = scmp.ne.s32.totalorder %s244, %s246
    %p250 = scmp.eq.s32.totalorder %s21, 0
    %p251 = por %p249, %p250
    %p252 = scmp.ne.s32.totalorder %s244, %s246
    %p253 = scmp.eq.s32.totalorder %s26, 1
    %p254 = por %p252, %p253
    %p255 = scmp.ne.s32.totalorder %s246, %s247
    %p256 = scmp.eq.s32.totalorder %s26, 0
    %p257 = por %p255, %p256
    %p258 = scmp.ne.s32.totalorder %s246, %s247
    %p259 = scmp.eq.s32.totalorder %s27, 1
    %p260 = por %p258, %p259
    %p262 = scmp.ne.s32.totalorder %s247, %s261
    %p263 = scmp.eq.s32.totalorder %s27, 0
    %p264 = por %p262, %p263
    %s266 = sadd.s32 %s265, 1
    %p269 = scmp.eq.s32.totalorder %s21, 1
    %p270 = scmp.ne.s32.totalorder %s265, %s267
    %p271 = scmp.eq.s32.totalorder %s21, 0
    %p272 = por %p270, %p271
    %p273 = scmp.ne.s32.totalorder %s265, %s267
    %p274 = scmp.eq.s32.totalorder %s26, 1
    %p275 = por %p273, %p274
    %p276 = scmp.ne.s32.totalorder %s267, %s268
    %p277 = scmp.eq.s32.totalorder %s26, 0
    %p278 = por %p276, %p277
    %p279 = scmp.ne.s32.totalorder %s267, %s268
    %p280 = scmp.eq.s32.totalorder %s27, 1
    %p281 = por %p279, %p280
    %p283 = scmp.ne.s32.totalorder %s268, %s282
    %p284 = scmp.eq.s32.totalorder %s27, 0
    %p285 = por %p283, %p284
    %s287 = sadd.s32 %s286, 1
    %p290 = scmp.eq.s32.totalorder %s21, 1
    %p291 = scmp.ne.s32.totalorder %s286, %s288
    %p292 = scmp.eq.s32.totalorder %s21, 0
    %p293 = por %p291, %p292
    %p294 = scmp.ne.s32.totalorder %s286, %s288
    %p295 = scmp.eq.s32.totalorder %s26, 1
    %p296 = por %p294, %p295
    %p297 = scmp.ne.s32.totalorder %s288, %s289
    %p298 = scmp.eq.s32.totalorder %s26, 0
    %p299 = por %p297, %p298
    %p300 = scmp.ne.s32.totalorder %s288, %s289
    %p301 = scmp.eq.s32.totalorder %s27, 1
    %p302 = por %p300, %p301
    %p304 = scmp.ne.s32.totalorder %s289, %s303
    %p305 = scmp.eq.s32.totalorder %s27, 0
    %p306 = por %p304, %p305
    %s308 = sadd.s32 %s307, 1
    %p311 = scmp.eq.s32.totalorder %s21, 1
    %p312 = scmp.ne.s32.totalorder %s307, %s309
    %p313 = scmp.eq.s32.totalorder %s21, 0
    %p314 = por %p312, %p313
    %p315 = scmp.ne.s32.totalorder %s307, %s309
    %p316 = scmp.eq.s32.totalorder %s26, 1
    %p317 = por %p315, %p316
    %p318 = scmp.ne.s32.totalorder %s309, %s310
    %p319 = scmp.eq.s32.totalorder %s26, 0
    %p320 = por %p318, %p319
    %p321 = scmp.ne.s32.totalorder %s309, %s310
    %p322 = scmp.eq.s32.totalorder %s27, 1
    %p323 = por %p321, %p322
    %p325 = scmp.ne.s32.totalorder %s310, %s324
    %p326 = scmp.eq.s32.totalorder %s27, 0
    %p327 = por %p325, %p326
    %s329 = sadd.s32 %s328, 1
    %p332 = scmp.eq.s32.totalorder %s21, 1
    %p333 = scmp.ne.s32.totalorder %s328, %s330
    %p334 = scmp.eq.s32.totalorder %s21, 0
    %p335 = por %p333, %p334
    %p336 = scmp.ne.s32.totalorder %s328, %s330
    %p337 = scmp.eq.s32.totalorder %s26, 1
    %p338 = por %p336, %p337
    %p339 = scmp.ne.s32.totalorder %s330, %s331
    %p340 = scmp.eq.s32.totalorder %s26, 0
    %p341 = por %p339, %p340
    %p342 = scmp.ne.s32.totalorder %s330, %s331
    %p343 = scmp.eq.s32.totalorder %s27, 1
    %p344 = por %p342, %p343
    %p346 = scmp.ne.s32.totalorder %s331, %s345
    %p347 = scmp.eq.s32.totalorder %s27, 0
    %p348 = por %p346, %p347
    %s349 = ssub.s32 %s21, %s28
    %p350 = scmp.eq.s32.totalorder %s349, 0
    %s352 = sadd.s32 %s351, 1
    %s353 = scalar_select %p350, %s351, %s352
    %p356 = pneg %p350
    %p357 = scmp.eq.s32.totalorder %s21, 1
    %p358 = por %p356, %p357
    %p359 = scmp.ne.s32.totalorder %s351, %s354
    %p360 = scmp.eq.s32.totalorder %s21, 0
    %p361 = por %p359, %p360
    %p362 = scmp.ne.s32.totalorder %s351, %s354
    %p363 = scmp.eq.s32.totalorder %s26, 1
    %p364 = por %p362, %p363
    %p365 = scmp.ne.s32.totalorder %s354, %s355
    %p366 = scmp.eq.s32.totalorder %s26, 0
    %p367 = por %p365, %p366
    %p368 = scmp.ne.s32.totalorder %s354, %s355
    %p369 = scmp.eq.s32.totalorder %s27, 1
    %p370 = por %p368, %p369
    %p372 = scmp.ne.s32.totalorder %s355, %s371
    %p373 = scmp.eq.s32.totalorder %s27, 0
    %p374 = por %p372, %p373
    %p375 = scmp.le.s32.totalorder 1, %s21
    %p376 = scmp.lt.s32.totalorder %s21, 3
    %p377 = pnand %p375, %p376
    %p378 = pneg %p377
    // Predicated region
    $region9: #{ae_cnn_forward.1} parent=5 // pred_check
      _
    $region10: #{ae_cnn_forward.1} parent=5 // pred_check_branch
      %380 = sbr.rel (%p377) target = $region12
    $region11: #{ae_cnn_forward.1} parent=5 // pred_region
      %s381 = ssub.s32 %s21, 1
      // Predicated region
      $region13: #{ae_cnn_forward.1} parent=11 // pred_check
        %p382 = pneg %p68
      $region14: #{ae_cnn_forward.1} parent=11 // pred_check_branch
        %384 = sbr.rel (%p382) target = $region16
      $region15: #{ae_cnn_forward.1} parent=11 // pred_region
        _
      $region16: #{ae_cnn_forward.1} parent=11 // pred_fallthru
        _
      // Predicated region
      $region17: #{ae_cnn_forward.1} parent=11 // pred_check
        %p385 = pneg %p89
      $region18: #{ae_cnn_forward.1} parent=11 // pred_check_branch
        %387 = sbr.rel (%p385) target = $region20
      $region19: #{ae_cnn_forward.1} parent=11 // pred_region
        _
      $region20: #{ae_cnn_forward.1} parent=11 // pred_fallthru
        _
      // Predicated region
      $region21: #{ae_cnn_forward.1} parent=11 // pred_check
        %p388 = pneg %p110
      $region22: #{ae_cnn_forward.1} parent=11 // pred_check_branch
        %390 = sbr.rel (%p388) target = $region24
      $region23: #{ae_cnn_forward.1} parent=11 // pred_region
        _
      $region24: #{ae_cnn_forward.1} parent=11 // pred_fallthru
        _
      // Predicated region
      $region25: #{ae_cnn_forward.1} parent=11 // pred_check
        %p391 = pneg %p131
      $region26: #{ae_cnn_forward.1} parent=11 // pred_check_branch
        %393 = sbr.rel (%p391) target = $region28
      $region27: #{ae_cnn_forward.1} parent=11 // pred_region
        _
      $region28: #{ae_cnn_forward.1} parent=11 // pred_fallthru
        _
      // Predicated region
      $region29: #{ae_cnn_forward.1} parent=11 // pred_check
        %p394 = pneg %p152
      $region30: #{ae_cnn_forward.1} parent=11 // pred_check_branch
        %396 = sbr.rel (%p394) target = $region32
      $region31: #{ae_cnn_forward.1} parent=11 // pred_region
        _
      $region32: #{ae_cnn_forward.1} parent=11 // pred_fallthru
        _
      // Predicated region
      $region33: #{ae_cnn_forward.1} parent=11 // pred_check
        %p397 = pneg %p173
      $region34: #{ae_cnn_forward.1} parent=11 // pred_check_branch
        %399 = sbr.rel (%p397) target = $region36
      $region35: #{ae_cnn_forward.1} parent=11 // pred_region
        _
      $region36: #{ae_cnn_forward.1} parent=11 // pred_fallthru
        _
      // Predicated region
      $region37: #{ae_cnn_forward.1} parent=11 // pred_check
        %p400 = pneg %p194
      $region38: #{ae_cnn_forward.1} parent=11 // pred_check_branch
        %402 = sbr.rel (%p400) target = $region40
      $region39: #{ae_cnn_forward.1} parent=11 // pred_region
        _
      $region40: #{ae_cnn_forward.1} parent=11 // pred_fallthru
        _
      // Predicated region
      $region41: #{ae_cnn_forward.1} parent=11 // pred_check
        %p403 = pneg %p215
      $region42: #{ae_cnn_forward.1} parent=11 // pred_check_branch
        %405 = sbr.rel (%p403) target = $region44
      $region43: #{ae_cnn_forward.1} parent=11 // pred_region
        _
      $region44: #{ae_cnn_forward.1} parent=11 // pred_fallthru
        _
      // Predicated region
      $region45: #{ae_cnn_forward.1} parent=11 // pred_check
        %p406 = pneg %p236
      $region46: #{ae_cnn_forward.1} parent=11 // pred_check_branch
        %408 = sbr.rel (%p406) target = $region48
      $region47: #{ae_cnn_forward.1} parent=11 // pred_region
        _
      $region48: #{ae_cnn_forward.1} parent=11 // pred_fallthru
        _
      // Predicated region
      $region49: #{ae_cnn_forward.1} parent=11 // pred_check
        %p409 = pneg %p257
      $region50: #{ae_cnn_forward.1} parent=11 // pred_check_branch
        %411 = sbr.rel (%p409) target = $region52
      $region51: #{ae_cnn_forward.1} parent=11 // pred_region
        _
      $region52: #{ae_cnn_forward.1} parent=11 // pred_fallthru
        _
      // Predicated region
      $region53: #{ae_cnn_forward.1} parent=11 // pred_check
        %p412 = pneg %p278
      $region54: #{ae_cnn_forward.1} parent=11 // pred_check_branch
        %414 = sbr.rel (%p412) target = $region56
      $region55: #{ae_cnn_forward.1} parent=11 // pred_region
        _
      $region56: #{ae_cnn_forward.1} parent=11 // pred_fallthru
        _
      // Predicated region
      $region57: #{ae_cnn_forward.1} parent=11 // pred_check
        %p415 = pneg %p299
      $region58: #{ae_cnn_forward.1} parent=11 // pred_check_branch
        %417 = sbr.rel (%p415) target = $region60
      $region59: #{ae_cnn_forward.1} parent=11 // pred_region
        _
      $region60: #{ae_cnn_forward.1} parent=11 // pred_fallthru
        _
      // Predicated region
      $region61: #{ae_cnn_forward.1} parent=11 // pred_check
        %p418 = pneg %p320
      $region62: #{ae_cnn_forward.1} parent=11 // pred_check_branch
        %420 = sbr.rel (%p418) target = $region64
      $region63: #{ae_cnn_forward.1} parent=11 // pred_region
        _
      $region64: #{ae_cnn_forward.1} parent=11 // pred_fallthru
        _
      // Predicated region
      $region65: #{ae_cnn_forward.1} parent=11 // pred_check
        %p421 = pneg %p341
      $region66: #{ae_cnn_forward.1} parent=11 // pred_check_branch
        %423 = sbr.rel (%p421) target = $region68
      $region67: #{ae_cnn_forward.1} parent=11 // pred_region
        _
      $region68: #{ae_cnn_forward.1} parent=11 // pred_fallthru
        _
    $region12: #{ae_cnn_forward.1} parent=5 // pred_fallthru
      _
    %p424 = scmp.lt.s32.totalorder %s21, 2
    // Predicated region
    $region69: #{ae_cnn_forward.1} parent=5 // pred_check
      %p425 = pneg %p424
    $region70: #{ae_cnn_forward.1} parent=5 // pred_check_branch
      %427 = sbr.rel (%p425) target = $region72
    $region71: #{ae_cnn_forward.1} parent=5 // pred_region
      // Predicated region
      $region73: #{ae_cnn_forward.1} parent=71 // pred_check
        %p428 = pneg %p41
      $region74: #{ae_cnn_forward.1} parent=71 // pred_check_branch
        %430 = sbr.rel (%p428) target = $region76
      $region75: #{ae_cnn_forward.1} parent=71 // pred_region
        %s431 = smul.u32 2, %s21
        %p432 = scmp.lt.s32.totalorder %s431, 3
        %s433 = scalar_select %p432, %s431, 3
        %s434 = smul.addr %s433, 2
        %s435 = scalar_lea.vmem %s0, %s434
        %s436 = smul.u32 2, %s21
      $region76: #{ae_cnn_forward.1} parent=71 // pred_fallthru
        _
    $region72: #{ae_cnn_forward.1} parent=5 // pred_fallthru
      _
    %p437 = scmp.le.s32.totalorder 1, %s21
    %p438 = scmp.lt.s32.totalorder %s21, 3
    %p439 = pnand %p437, %p438
    %p440 = pneg %p439
    // Predicated region
    $region77: #{ae_cnn_forward.1} parent=5 // pred_check
      _
    $region78: #{ae_cnn_forward.1} parent=5 // pred_check_branch
      %442 = sbr.rel (%p439) target = $region80
    $region79: #{ae_cnn_forward.1} parent=5 // pred_region
      %s443 = ssub.s32 %s21, 1
      %s444 = smul.u32 2, %s26
      %p445 = scmp.lt.s32.totalorder %s444, 3
      %s446 = scalar_select %p445, %s444, 3
      %s447 = smul.addr %s446, 2
      %s448 = scalar_lea.vmem %s0, %s447
      %p449 = pneg %p47
      %p450 = pneg %p44
      %p451 = pneg %p68
      %p452 = pneg %p65
      %p453 = pneg %p89
      %p454 = pneg %p86
      %p455 = pneg %p110
      %p456 = pneg %p107
      %p457 = pneg %p131
      %p458 = pneg %p128
      %p459 = pneg %p152
      %p460 = pneg %p149
      %p461 = pneg %p173
      %p462 = pneg %p170
      %p463 = pneg %p194
      %p464 = pneg %p191
      %p465 = pneg %p215
      %p466 = pneg %p212
      %p467 = pneg %p236
      %p468 = pneg %p233
      %p469 = pneg %p257
      %p470 = pneg %p254
      %p471 = pneg %p278
      %p472 = pneg %p275
      %p473 = pneg %p299
      %p474 = pneg %p296
      %p475 = pneg %p320
      %p476 = pneg %p317
      %p477 = pneg %p341
      %p478 = pneg %p338
      %p479 = pneg %p367
      %p480 = pneg %p364
      %s481 = smul.u32 2, %s26
      %p482 = scmp.lt.s32.totalorder %s481, 3
      %s483 = scalar_select %p482, %s481, 3
      %s484 = smul.addr %s483, 2
      %s485 = scalar_lea.vmem %s15, %s484
      %s486 = smul.u32 2, %s26
      %p487 = scmp.lt.s32.totalorder %s486, 3
      %s488 = scalar_select %p487, %s486, 3
      %s489 = smul.addr %s488, 2
      %s490 = scalar_lea.vmem %s0, %s489
      %s491 = smul.u32 2, %s26
      %s492 = smul.u32 2, %s26
      %p493 = scmp.lt.s32.totalorder %s492, 3
      %s494 = scalar_select %p493, %s492, 3
      %s495 = smul.addr %s494, 2
      %s496 = scalar_lea.vmem %s15, %s495
      %s497 = smul.u32 2, %s26
      %v498 = vld [vmem:[%s490] sm:$0xf]
      %v499 = vld [vmem:[%s1] sm:$0xff]
      %501 = vset.pattern.permute.xlu0 0
      %502 = vperm.xlu0 %501, %v499
      %v503 = vpop.permute.xlu0 %502
      %v506 = vlaneseq
      %v507 = vshrl.u32 %v506, 7
      %v508 = vsub.s32 0, %v507
      %v509 = vrot.slane %v498, %v508
      %v510 = vlaneseq
      %v511 = vshrl.u32 %v510, 7
      %v512 = vsub.s32 2, %v511
      %v513 = vrot.slane %v498, %v512
      %v516 = vlaneseq
      %v517 = vshrl.u32 %v516, 7
      %v518 = vsub.s32 0, %v517
      %v519 = vrot.slane %v509, %v518
      %v520 = vlaneseq
      %v521 = vshrl.u32 %v520, 7
      %v522 = vsub.s32 0, %v521
      %v523 = vrot.slane %v513, %v522
      %v524 = vmul.f32 %v503, %v519
      %v525 = vmul.f32 %v503, %v523
      %526 = vset.pattern.permute.xlu0 1
      %527 = vperm.xlu0 %526, %v499
      %v528 = vpop.permute.xlu0 %527
      %v530 = vlaneseq
      %v531 = vshrl.u32 %v530, 7
      %v532 = vsub.s32 1, %v531
      %v533 = vrot.slane %v498, %v532
      %v534 = vlaneseq
      %v535 = vshrl.u32 %v534, 7
      %v536 = vsub.s32 3, %v535
      %v537 = vrot.slane %v498, %v536
      %v540 = vlaneseq
      %v541 = vshrl.u32 %v540, 7
      %v542 = vsub.s32 1, %v541
      %v543 = vrot.slane %v533, %v542
      %v544 = vlaneseq
      %v545 = vshrl.u32 %v544, 7
      %v546 = vsub.s32 1, %v545
      %v547 = vrot.slane %v537, %v546
      %v548 = vmul.f32 %v528, %v543
      %v549 = vmul.f32 %v528, %v547
      %v550 = vadd.f32 %v524, %v548
      %v551 = vadd.f32 %v525, %v549
      %v552 = vld [vmem:[%s2] sm:$0xff]
      %554 = vset.pattern.permute.xlu0 0
      %555 = vperm.xlu0 %554, %v552
      %v556 = vpop.permute.xlu0 %555
      %v558 = vadd.f32 %v550, %v556
      %v559 = vadd.f32 %v551, %v556
      %vm560 = vcmp.gt.f32.partialorder %v558, 0.0
      %vm561 = vcmp.gt.f32.partialorder %v559, 0.0
      %v562 = vmul.f32 %v558, 0.2
      %v563 = vmul.f32 %v559, 0.2
      %v564 = vsel %vm560, %v558, %v562
      %v565 = vsel %vm561, %v559, %v563
      %v566 = vld [vmem:[%s3] sm:$0xff]
      %v567 = vld [vmem:[%s4] sm:$0xff]
      %569 = vset.pattern.permute.xlu0 0
      %570 = vperm.xlu0 %569, %v566
      %v571 = vpop.permute.xlu0 %570
      %v573 = vlaneseq
      %v574 = vshrl.u32 %v573, 7
      %v575 = vsub.s32 0, %v574
      %v576 = vrot.slane %v564, %v575
      %v577 = vlaneseq
      %v578 = vshrl.u32 %v577, 7
      %v579 = vsub.s32 0, %v578
      %v580 = vrot.slane %v565, %v579
      %v581 = vmul.f32 %v571, %v576
      %v582 = vmul.f32 %v571, %v580
      %583 = vset.pattern.permute.xlu0 1
      %584 = vperm.xlu0 %583, %v566
      %v585 = vpop.permute.xlu0 %584
      %v587 = vlaneseq
      %v588 = vshrl.u32 %v587, 7
      %v589 = vsub.s32 1, %v588
      %v590 = vrot.slane %v564, %v589
      %v591 = vlaneseq
      %v592 = vshrl.u32 %v591, 7
      %v593 = vsub.s32 1, %v592
      %v594 = vrot.slane %v565, %v593
      %v595 = vmul.f32 %v585, %v590
      %v596 = vmul.f32 %v585, %v594
      %v597 = vadd.f32 %v581, %v595
      %v598 = vadd.f32 %v582, %v596
      %599 = vset.pattern.permute.xlu0 2
      %600 = vperm.xlu0 %599, %v566
      %v601 = vpop.permute.xlu0 %600
      %v603 = vlaneseq
      %v604 = vshrl.u32 %v603, 7
      %v605 = vsub.s32 2, %v604
      %v606 = vrot.slane %v564, %v605
      %v607 = vlaneseq
      %v608 = vshrl.u32 %v607, 7
      %v609 = vsub.s32 2, %v608
      %v610 = vrot.slane %v565, %v609
      %v611 = vmul.f32 %v601, %v606
      %v612 = vmul.f32 %v601, %v610
      %v613 = vadd.f32 %v597, %v611
      %v614 = vadd.f32 %v598, %v612
      %615 = vset.pattern.permute.xlu0 3
      %616 = vperm.xlu0 %615, %v566
      %v617 = vpop.permute.xlu0 %616
      %v619 = vlaneseq
      %v620 = vshrl.u32 %v619, 7
      %v621 = vsub.s32 3, %v620
      %v622 = vrot.slane %v564, %v621
      %v623 = vlaneseq
      %v624 = vshrl.u32 %v623, 7
      %v625 = vsub.s32 3, %v624
      %v626 = vrot.slane %v565, %v625
      %v627 = vmul.f32 %v617, %v622
      %v628 = vmul.f32 %v617, %v626
      %v629 = vadd.f32 %v613, %v627
      %v630 = vadd.f32 %v614, %v628
      %631 = vset.pattern.permute.xlu0 4
      %632 = vperm.xlu0 %631, %v566
      %v633 = vpop.permute.xlu0 %632
      %v635 = vlaneseq
      %v636 = vshrl.u32 %v635, 7
      %v637 = vsub.s32 4, %v636
      %v638 = vrot.slane %v564, %v637
      %v639 = vlaneseq
      %v640 = vshrl.u32 %v639, 7
      %v641 = vsub.s32 4, %v640
      %v642 = vrot.slane %v565, %v641
      %v643 = vmul.f32 %v633, %v638
      %v644 = vmul.f32 %v633, %v642
      %v645 = vadd.f32 %v629, %v643
      %v646 = vadd.f32 %v630, %v644
      %647 = vset.pattern.permute.xlu0 5
      %648 = vperm.xlu0 %647, %v566
      %v649 = vpop.permute.xlu0 %648
      %v651 = vlaneseq
      %v652 = vshrl.u32 %v651, 7
      %v653 = vsub.s32 5, %v652
      %v654 = vrot.slane %v564, %v653
      %v655 = vlaneseq
      %v656 = vshrl.u32 %v655, 7
      %v657 = vsub.s32 5, %v656
      %v658 = vrot.slane %v565, %v657
      %v659 = vmul.f32 %v649, %v654
      %v660 = vmul.f32 %v649, %v658
      %v661 = vadd.f32 %v645, %v659
      %v662 = vadd.f32 %v646, %v660
      %663 = vset.pattern.permute.xlu0 6
      %664 = vperm.xlu0 %663, %v566
      %v665 = vpop.permute.xlu0 %664
      %v667 = vlaneseq
      %v668 = vshrl.u32 %v667, 7
      %v669 = vsub.s32 6, %v668
      %v670 = vrot.slane %v564, %v669
      %v671 = vlaneseq
      %v672 = vshrl.u32 %v671, 7
      %v673 = vsub.s32 6, %v672
      %v674 = vrot.slane %v565, %v673
      %v675 = vmul.f32 %v665, %v670
      %v676 = vmul.f32 %v665, %v674
      %v677 = vadd.f32 %v661, %v675
      %v678 = vadd.f32 %v662, %v676
      %679 = vset.pattern.permute.xlu0 7
      %680 = vperm.xlu0 %679, %v566
      %v681 = vpop.permute.xlu0 %680
      %v683 = vlaneseq
      %v684 = vshrl.u32 %v683, 7
      %v685 = vsub.s32 7, %v684
      %v686 = vrot.slane %v564, %v685
      %v687 = vlaneseq
      %v688 = vshrl.u32 %v687, 7
      %v689 = vsub.s32 7, %v688
      %v690 = vrot.slane %v565, %v689
      %v691 = vmul.f32 %v681, %v686
      %v692 = vmul.f32 %v681, %v690
      %v693 = vadd.f32 %v677, %v691
      %v694 = vadd.f32 %v678, %v692
      %696 = vset.pattern.permute.xlu0 0
      %697 = vperm.xlu0 %696, %v567
      %v698 = vpop.permute.xlu0 %697
      %v700 = vadd.f32 %v693, %v698
      %v701 = vadd.f32 %v694, %v698
      %vm702 = vcmp.gt.f32.partialorder %v700, 0.0
      %vm703 = vcmp.gt.f32.partialorder %v701, 0.0
      %v704 = vmul.f32 %v700, 0.2
      %v705 = vmul.f32 %v701, 0.2
      %v706 = vsel %vm702, %v700, %v704
      %v707 = vsel %vm703, %v701, %v705
      %v708 = vld [vmem:[%s5] sm:$0xff]
      %v709 = vld [vmem:[%s5 + $0x8] sm:$0xff]
      %v710 = vld [vmem:[%s6] sm:$0xff]
      %v711 = vld [vmem:[%s6 + $0x8] sm:$0xff]
      %713 = vset.pattern.permute.xlu0 0
      %714 = vperm.xlu0 %713, %v710
      %v715 = vpop.permute.xlu0 %714
      %718 = vset.pattern.permute.xlu0 0
      %719 = vperm.xlu0 %718, %v711
      %v720 = vpop.permute.xlu0 %719
      %vm722 = vcmask 64512
      %v724 = vsel %vm722, %v708, 0
      %v727 = vsel %vm722, %v709, 0
      %729 = vmatprep.subr.mxu0 %v707
      %730 = vmatpush1.msra.mxu0 %v706
      %731 = vmatprep.subr.mxu0 0.0
      %732 = vmatpush1.msra.mxu0 0.0
      %733 = vmatprep.subr.mxu0 0.0
      %734 = vmatpush1.msra.mxu0 0.0
      %735 = vmatprep.subr.mxu0 0.0
      %736 = vmatpush1.msra.mxu0 0.0
      %737 = vmatprep.subr.mxu0 0.0
      %738 = vmatpush1.msra.mxu0 0.0
      %739 = vmatprep.subr.mxu0 0.0
      %740 = vmatpush1.msra.mxu0 0.0
      %741 = vmatprep.subr.mxu0 0.0
      %742 = vmatpush1.msra.mxu0 0.0
      %743 = vmatprep.subr.mxu0 0.0
      %744 = vmatpush1.msra.mxu0 0.0
      %745 = vmatprep.subr.mxu0 0.0
      %746 = vmatpush1.msra.mxu0 0.0
      %747 = vmatprep.subr.mxu0 0.0
      %748 = vmatpush1.msra.mxu0 0.0
      %749 = vmatprep.subr.mxu0 0.0
      %750 = vmatpush1.msra.mxu0 0.0
      %751 = vmatprep.subr.mxu0 0.0
      %752 = vmatpush1.msra.mxu0 0.0
      %753 = vmatprep.subr.mxu0 0.0
      %754 = vmatpush1.msra.mxu0 0.0
      %755 = vmatprep.subr.mxu0 0.0
      %756 = vmatpush1.msra.mxu0 0.0
      %757 = vmatprep.subr.mxu0 0.0
      %758 = vmatpush1.msra.mxu0 0.0
      %759 = vmatprep.subr.mxu0 0.0
      %760 = vmatpush1.msra.mxu0 0.0
      %761 = vmatprep.subr.mxu0 0.0
      %762 = vmatpush1.msra.mxu0 0.0
      %763 = vmatprep.subr.mxu0 0.0
      %764 = vmatpush1.msra.mxu0 0.0
      %765 = vmatprep.subr.mxu0 0.0
      %766 = vmatpush1.msra.mxu0 0.0
      %767 = vmatprep.subr.mxu0 0.0
      %768 = vmatpush1.msra.mxu0 0.0
      %769 = vmatprep.subr.mxu0 0.0
      %770 = vmatpush1.msra.mxu0 0.0
      %771 = vmatprep.subr.mxu0 0.0
      %772 = vmatpush1.msra.mxu0 0.0
      %773 = vmatprep.subr.mxu0 0.0
      %774 = vmatpush1.msra.mxu0 0.0
      %775 = vmatprep.subr.mxu0 0.0
      %776 = vmatpush1.msra.mxu0 0.0
      %777 = vmatprep.subr.mxu0 0.0
      %778 = vmatpush1.msra.mxu0 0.0
      %779 = vmatprep.subr.mxu0 0.0
      %780 = vmatpush1.msra.mxu0 0.0
      %781 = vmatprep.subr.mxu0 0.0
      %782 = vmatpush1.msra.mxu0 0.0
      %783 = vmatprep.subr.mxu0 0.0
      %784 = vmatpush1.msra.mxu0 0.0
      %785 = vmatprep.subr.mxu0 0.0
      %786 = vmatpush1.msra.mxu0 0.0
      %787 = vmatprep.subr.mxu0 0.0
      %788 = vmatpush1.msra.mxu0 0.0
      %789 = vmatprep.subr.mxu0 0.0
      %790 = vmatpush1.msra.mxu0 0.0
      %791 = vmatprep.subr.mxu0 0.0
      %792 = vmatpush1.msra.mxu0 0.0
      %793 = vmatprep.mubr.f32.mxu0 0.0
      %794 = vmatmul.mubr.f32.gmra.mrb[0].mxu0 %v724
      %v795 = vpop.f32.mrb[0].mxu0
      %v796 = vadd.f32 %v715, %v795
      %v797 = vpop.f32.mrb[0].mxu0
      %v798 = vadd.f32 %v715, %v797
      %799 = vmatprep.mubr.f32.mxu0 0.0
      %800 = vmatmul.mubr.f32.gmra.mrb[0].mxu0 %v727
      %v801 = vpop.f32.mrb[0].mxu0
      %v802 = vadd.f32 %v720, %v801
      %v803 = vpop.f32.mrb[0].mxu0
      %v804 = vadd.f32 %v720, %v803
      %805 = vdwg.mxu0
      %vm806 = vcmp.gt.f32.partialorder %v796, 0.0
      %vm807 = vcmp.gt.f32.partialorder %v798, 0.0
      %vm808 = vcmp.gt.f32.partialorder %v802, 0.0
      %vm809 = vcmp.gt.f32.partialorder %v804, 0.0
      %v810 = vmul.f32 %v796, 0.2
      %v811 = vmul.f32 %v798, 0.2
      %v812 = vmul.f32 %v802, 0.2
      %v813 = vmul.f32 %v804, 0.2
      %v814 = vsel %vm806, %v796, %v810
      %v815 = vsel %vm807, %v798, %v811
      %v816 = vsel %vm808, %v802, %v812
      %v817 = vsel %vm809, %v804, %v813
      %v818 = vld [vmem:[%s7] sm:$0xff]
      %v819 = vld [vmem:[%s7 + $0x8] sm:$0xff]
      %v820 = vld [vmem:[%s8] sm:$0xff]
      %v821 = vld [vmem:[%s8 + $0x8] sm:$0xff]
      %823 = vset.pattern.permute.xlu0 0
      %824 = vperm.xlu0 %823, %v820
      %v825 = vpop.permute.xlu0 %824
      %828 = vset.pattern.permute.xlu0 0
      %829 = vperm.xlu0 %828, %v821
      %v830 = vpop.permute.xlu0 %829
      %vm832 = vcmask 130048
      %v834 = vsel %vm832, %v818, 0
      %v837 = vsel %vm832, %v819, 0
      %839 = vmatprep.subr.mxu0 %v815
      %840 = vmatpush1.msra.mxu0 %v814
      %841 = vmatprep.subr.mxu0 %v817
      %842 = vmatpush1.msra.mxu0 %v816
      %843 = vmatprep.subr.mxu0 0.0
      %844 = vmatpush1.msra.mxu0 0.0
      %845 = vmatprep.subr.mxu0 0.0
      %846 = vmatpush1.msra.mxu0 0.0
      %847 = vmatprep.subr.mxu0 0.0
      %848 = vmatpush1.msra.mxu0 0.0
      %849 = vmatprep.subr.mxu0 0.0
      %850 = vmatpush1.msra.mxu0 0.0
      %851 = vmatprep.subr.mxu0 0.0
      %852 = vmatpush1.msra.mxu0 0.0
      %853 = vmatprep.subr.mxu0 0.0
      %854 = vmatpush1.msra.mxu0 0.0
      %855 = vmatprep.subr.mxu0 0.0
      %856 = vmatpush1.msra.mxu0 0.0
      %857 = vmatprep.subr.mxu0 0.0
      %858 = vmatpush1.msra.mxu0 0.0
      %859 = vmatprep.subr.mxu0 0.0
      %860 = vmatpush1.msra.mxu0 0.0
      %861 = vmatprep.subr.mxu0 0.0
      %862 = vmatpush1.msra.mxu0 0.0
      %863 = vmatprep.subr.mxu0 0.0
      %864 = vmatpush1.msra.mxu0 0.0
      %865 = vmatprep.subr.mxu0 0.0
      %866 = vmatpush1.msra.mxu0 0.0
      %867 = vmatprep.subr.mxu0 0.0
      %868 = vmatpush1.msra.mxu0 0.0
      %869 = vmatprep.subr.mxu0 0.0
      %870 = vmatpush1.msra.mxu0 0.0
      %871 = vmatprep.subr.mxu0 0.0
      %872 = vmatpush1.msra.mxu0 0.0
      %873 = vmatprep.subr.mxu0 0.0
      %874 = vmatpush1.msra.mxu0 0.0
      %875 = vmatprep.subr.mxu0 0.0
      %876 = vmatpush1.msra.mxu0 0.0
      %877 = vmatprep.subr.mxu0 0.0
      %878 = vmatpush1.msra.mxu0 0.0
      %879 = vmatprep.subr.mxu0 0.0
      %880 = vmatpush1.msra.mxu0 0.0
      %881 = vmatprep.subr.mxu0 0.0
      %882 = vmatpush1.msra.mxu0 0.0
      %883 = vmatprep.subr.mxu0 0.0
      %884 = vmatpush1.msra.mxu0 0.0
      %885 = vmatprep.subr.mxu0 0.0
      %886 = vmatpush1.msra.mxu0 0.0
      %887 = vmatprep.subr.mxu0 0.0
      %888 = vmatpush1.msra.mxu0 0.0
      %889 = vmatprep.subr.mxu0 0.0
      %890 = vmatpush1.msra.mxu0 0.0
      %891 = vmatprep.subr.mxu0 0.0
      %892 = vmatpush1.msra.mxu0 0.0
      %893 = vmatprep.subr.mxu0 0.0
      %894 = vmatpush1.msra.mxu0 0.0
      %895 = vmatprep.subr.mxu0 0.0
      %896 = vmatpush1.msra.mxu0 0.0
      %897 = vmatprep.subr.mxu0 0.0
      %898 = vmatpush1.msra.mxu0 0.0
      %899 = vmatprep.subr.mxu0 0.0
      %900 = vmatpush1.msra.mxu0 0.0
      %901 = vmatprep.subr.mxu0 0.0
      %902 = vmatpush1.msra.mxu0 0.0
      %903 = vmatprep.mubr.f32.mxu0 0.0
      %904 = vmatmul.mubr.f32.gmra.mrb[0].mxu0 %v834
      %v905 = vpop.f32.mrb[0].mxu0
      %v906 = vadd.f32 %v825, %v905
      %v907 = vpop.f32.mrb[0].mxu0
      %v908 = vadd.f32 %v825, %v907
      %909 = vmatprep.mubr.f32.mxu0 0.0
      %910 = vmatmul.mubr.f32.gmra.mrb[0].mxu0 %v837
      %v911 = vpop.f32.mrb[0].mxu0
      %v912 = vadd.f32 %v830, %v911
      %v913 = vpop.f32.mrb[0].mxu0
      %v914 = vadd.f32 %v830, %v913
      %915 = vdwg.mxu0
      %vm916 = vcmp.gt.f32.partialorder %v906, 0.0
      %vm917 = vcmp.gt.f32.partialorder %v908, 0.0
      %vm918 = vcmp.gt.f32.partialorder %v912, 0.0
      %vm919 = vcmp.gt.f32.partialorder %v914, 0.0
      %v920 = vmul.f32 %v906, 0.2
      %v921 = vmul.f32 %v908, 0.2
      %v922 = vmul.f32 %v912, 0.2
      %v923 = vmul.f32 %v914, 0.2
      %v924 = vsel %vm916, %v906, %v920
      %v925 = vsel %vm917, %v908, %v921
      %v926 = vsel %vm918, %v912, %v922
      %v927 = vsel %vm919, %v914, %v923
      %s928 = scalar_lea.vmem %s7, 16
      %v929 = vld [vmem:[%s928] sm:$0xff]
      %v930 = vld [vmem:[%s928 + $0x8] sm:$0xff]
      %s931 = scalar_lea.vmem %s8, 16
      %v932 = vld [vmem:[%s931] sm:$0xff]
      %v933 = vld [vmem:[%s931 + $0x8] sm:$0xff]
      %935 = vset.pattern.permute.xlu0 0
      %936 = vperm.xlu0 %935, %v932
      %v937 = vpop.permute.xlu0 %936
      %940 = vset.pattern.permute.xlu0 0
      %941 = vperm.xlu0 %940, %v933
      %v942 = vpop.permute.xlu0 %941
      %v945 = vsel %vm832, %v929, 0
      %v948 = vsel %vm832, %v930, 0
      %950 = vmatprep.subr.mxu0 %v925
      %951 = vmatpush1.msra.mxu0 %v924
      %952 = vmatprep.subr.mxu0 %v927
      %953 = vmatpush1.msra.mxu0 %v926
      %954 = vmatprep.subr.mxu0 0.0
      %955 = vmatpush1.msra.mxu0 0.0
      %956 = vmatprep.subr.mxu0 0.0
      %957 = vmatpush1.msra.mxu0 0.0
      %958 = vmatprep.subr.mxu0 0.0
      %959 = vmatpush1.msra.mxu0 0.0
      %960 = vmatprep.subr.mxu0 0.0
      %961 = vmatpush1.msra.mxu0 0.0
      %962 = vmatprep.subr.mxu0 0.0
      %963 = vmatpush1.msra.mxu0 0.0
      %964 = vmatprep.subr.mxu0 0.0
      %965 = vmatpush1.msra.mxu0 0.0
      %966 = vmatprep.subr.mxu0 0.0
      %967 = vmatpush1.msra.mxu0 0.0
      %968 = vmatprep.subr.mxu0 0.0
      %969 = vmatpush1.msra.mxu0 0.0
      %970 = vmatprep.subr.mxu0 0.0
      %971 = vmatpush1.msra.mxu0 0.0
      %972 = vmatprep.subr.mxu0 0.0
      %973 = vmatpush1.msra.mxu0 0.0
      %974 = vmatprep.subr.mxu0 0.0
      %975 = vmatpush1.msra.mxu0 0.0
      %976 = vmatprep.subr.mxu0 0.0
      %977 = vmatpush1.msra.mxu0 0.0
      %978 = vmatprep.subr.mxu0 0.0
      %979 = vmatpush1.msra.mxu0 0.0
      %980 = vmatprep.subr.mxu0 0.0
      %981 = vmatpush1.msra.mxu0 0.0
      %982 = vmatprep.subr.mxu0 0.0
      %983 = vmatpush1.msra.mxu0 0.0
      %984 = vmatprep.subr.mxu0 0.0
      %985 = vmatpush1.msra.mxu0 0.0
      %986 = vmatprep.subr.mxu0 0.0
      %987 = vmatpush1.msra.mxu0 0.0
      %988 = vmatprep.subr.mxu0 0.0
      %989 = vmatpush1.msra.mxu0 0.0
      %990 = vmatprep.subr.mxu0 0.0
      %991 = vmatpush1.msra.mxu0 0.0
      %992 = vmatprep.subr.mxu0 0.0
      %993 = vmatpush1.msra.mxu0 0.0
      %994 = vmatprep.subr.mxu0 0.0
      %995 = vmatpush1.msra.mxu0 0.0
      %996 = vmatprep.subr.mxu0 0.0
      %997 = vmatpush1.msra.mxu0 0.0
      %998 = vmatprep.subr.mxu0 0.0
      %999 = vmatpush1.msra.mxu0 0.0
      %1000 = vmatprep.subr.mxu0 0.0
      %1001 = vmatpush1.msra.mxu0 0.0
      %1002 = vmatprep.subr.mxu0 0.0
      %1003 = vmatpush1.msra.mxu0 0.0
      %1004 = vmatprep.subr.mxu0 0.0
      %1005 = vmatpush1.msra.mxu0 0.0
      %1006 = vmatprep.subr.mxu0 0.0
      %1007 = vmatpush1.msra.mxu0 0.0
      %1008 = vmatprep.subr.mxu0 0.0
      %1009 = vmatpush1.msra.mxu0 0.0
      %1010 = vmatprep.subr.mxu0 0.0
      %1011 = vmatpush1.msra.mxu0 0.0
      %1012 = vmatprep.subr.mxu0 0.0
      %1013 = vmatpush1.msra.mxu0 0.0
      %1014 = vmatprep.mubr.f32.mxu0 0.0
      %1015 = vmatmul.mubr.f32.gmra.mrb[0].mxu0 %v945
      %v1016 = vpop.f32.mrb[0].mxu0
      %v1017 = vadd.f32 %v937, %v1016
      %v1018 = vpop.f32.mrb[0].mxu0
      %v1019 = vadd.f32 %v937, %v1018
      %1020 = vmatprep.mubr.f32.mxu0 0.0
      %1021 = vmatmul.mubr.f32.gmra.mrb[0].mxu0 %v948
      %v1022 = vpop.f32.mrb[0].mxu0
      %v1023 = vadd.f32 %v942, %v1022
      %v1024 = vpop.f32.mrb[0].mxu0
      %v1025 = vadd.f32 %v942, %v1024
      %1026 = vdwg.mxu0
      %v1027 = vmax.f32 %v1017, 0.0
      %v1028 = vmax.f32 %v1019, 0.0
      %v1029 = vmax.f32 %v1023, 0.0
      %v1030 = vmax.f32 %v1025, 0.0
      %s1031 = scalar_lea.vmem %s7, 32
      %v1032 = vld [vmem:[%s1031] sm:$0xff]
      %v1033 = vld [vmem:[%s1031 + $0x8] sm:$0xff]
      %s1034 = scalar_lea.vmem %s8, 32
      %v1035 = vld [vmem:[%s1034] sm:$0xff]
      %v1036 = vld [vmem:[%s1034 + $0x8] sm:$0xff]
      %1038 = vset.pattern.permute.xlu0 0
      %1039 = vperm.xlu0 %1038, %v1035
      %v1040 = vpop.permute.xlu0 %1039
      %1043 = vset.pattern.permute.xlu0 0
      %1044 = vperm.xlu0 %1043, %v1036
      %v1045 = vpop.permute.xlu0 %1044
      %v1048 = vsel %vm832, %v1032, 0
      %v1051 = vsel %vm832, %v1033, 0
      %1053 = vmatprep.subr.mxu0 %v1028
      %1054 = vmatpush1.msra.mxu0 %v1027
      %1055 = vmatprep.subr.mxu0 %v1030
      %1056 = vmatpush1.msra.mxu0 %v1029
      %1057 = vmatprep.subr.mxu0 0.0
      %1058 = vmatpush1.msra.mxu0 0.0
      %1059 = vmatprep.subr.mxu0 0.0
      %1060 = vmatpush1.msra.mxu0 0.0
      %1061 = vmatprep.subr.mxu0 0.0
      %1062 = vmatpush1.msra.mxu0 0.0
      %1063 = vmatprep.subr.mxu0 0.0
      %1064 = vmatpush1.msra.mxu0 0.0
      %1065 = vmatprep.subr.mxu0 0.0
      %1066 = vmatpush1.msra.mxu0 0.0
      %1067 = vmatprep.subr.mxu0 0.0
      %1068 = vmatpush1.msra.mxu0 0.0
      %1069 = vmatprep.subr.mxu0 0.0
      %1070 = vmatpush1.msra.mxu0 0.0
      %1071 = vmatprep.subr.mxu0 0.0
      %1072 = vmatpush1.msra.mxu0 0.0
      %1073 = vmatprep.subr.mxu0 0.0
      %1074 = vmatpush1.msra.mxu0 0.0
      %1075 = vmatprep.subr.mxu0 0.0
      %1076 = vmatpush1.msra.mxu0 0.0
      %1077 = vmatprep.subr.mxu0 0.0
      %1078 = vmatpush1.msra.mxu0 0.0
      %1079 = vmatprep.subr.mxu0 0.0
      %1080 = vmatpush1.msra.mxu0 0.0
      %1081 = vmatprep.subr.mxu0 0.0
      %1082 = vmatpush1.msra.mxu0 0.0
      %1083 = vmatprep.subr.mxu0 0.0
      %1084 = vmatpush1.msra.mxu0 0.0
      %1085 = vmatprep.subr.mxu0 0.0
      %1086 = vmatpush1.msra.mxu0 0.0
      %1087 = vmatprep.subr.mxu0 0.0
      %1088 = vmatpush1.msra.mxu0 0.0
      %1089 = vmatprep.subr.mxu0 0.0
      %1090 = vmatpush1.msra.mxu0 0.0
      %1091 = vmatprep.subr.mxu0 0.0
      %1092 = vmatpush1.msra.mxu0 0.0
      %1093 = vmatprep.subr.mxu0 0.0
      %1094 = vmatpush1.msra.mxu0 0.0
      %1095 = vmatprep.subr.mxu0 0.0
      %1096 = vmatpush1.msra.mxu0 0.0
      %1097 = vmatprep.subr.mxu0 0.0
      %1098 = vmatpush1.msra.mxu0 0.0
      %1099 = vmatprep.subr.mxu0 0.0
      %1100 = vmatpush1.msra.mxu0 0.0
      %1101 = vmatprep.subr.mxu0 0.0
      %1102 = vmatpush1.msra.mxu0 0.0
      %1103 = vmatprep.subr.mxu0 0.0
      %1104 = vmatpush1.msra.mxu0 0.0
      %1105 = vmatprep.subr.mxu0 0.0
      %1106 = vmatpush1.msra.mxu0 0.0
      %1107 = vmatprep.subr.mxu0 0.0
      %1108 = vmatpush1.msra.mxu0 0.0
      %1109 = vmatprep.subr.mxu0 0.0
      %1110 = vmatpush1.msra.mxu0 0.0
      %1111 = vmatprep.subr.mxu0 0.0
      %1112 = vmatpush1.msra.mxu0 0.0
      %1113 = vmatprep.subr.mxu0 0.0
      %1114 = vmatpush1.msra.mxu0 0.0
      %1115 = vmatprep.subr.mxu0 0.0
      %1116 = vmatpush1.msra.mxu0 0.0
      %1117 = vmatprep.mubr.f32.mxu0 0.0
      %1118 = vmatmul.mubr.f32.gmra.mrb[0].mxu0 %v1048
      %v1119 = vpop.f32.mrb[0].mxu0
      %v1120 = vadd.f32 %v1040, %v1119
      %v1121 = vpop.f32.mrb[0].mxu0
      %v1122 = vadd.f32 %v1040, %v1121
      %1123 = vmatprep.mubr.f32.mxu0 0.0
      %1124 = vmatmul.mubr.f32.gmra.mrb[0].mxu0 %v1051
      %v1125 = vpop.f32.mrb[0].mxu0
      %v1126 = vadd.f32 %v1045, %v1125
      %v1127 = vpop.f32.mrb[0].mxu0
      %v1128 = vadd.f32 %v1045, %v1127
      %1129 = vdwg.mxu0
      %v1130 = vmax.f32 %v1120, 0.0
      %v1131 = vmax.f32 %v1122, 0.0
      %v1132 = vmax.f32 %v1126, 0.0
      %v1133 = vmax.f32 %v1128, 0.0
      %s1134 = scalar_lea.vmem %s7, 48
      %v1135 = vld [vmem:[%s1134] sm:$0xff]
      %v1136 = vld [vmem:[%s1134 + $0x8] sm:$0xff]
      %s1137 = scalar_lea.vmem %s8, 48
      %v1138 = vld [vmem:[%s1137] sm:$0xff]
      %v1139 = vld [vmem:[%s1137 + $0x8] sm:$0xff]
      %1141 = vset.pattern.permute.xlu0 0
      %1142 = vperm.xlu0 %1141, %v1138
      %v1143 = vpop.permute.xlu0 %1142
      %1146 = vset.pattern.permute.xlu0 0
      %1147 = vperm.xlu0 %1146, %v1139
      %v1148 = vpop.permute.xlu0 %1147
      %v1151 = vsel %vm832, %v1135, 0
      %v1154 = vsel %vm832, %v1136, 0
      %1156 = vmatprep.subr.mxu0 %v1131
      %1157 = vmatpush1.msra.mxu0 %v1130
      %1158 = vmatprep.subr.mxu0 %v1133
      %1159 = vmatpush1.msra.mxu0 %v1132
      %1160 = vmatprep.subr.mxu0 0.0
      %1161 = vmatpush1.msra.mxu0 0.0
      %1162 = vmatprep.subr.mxu0 0.0
      %1163 = vmatpush1.msra.mxu0 0.0
      %1164 = vmatprep.subr.mxu0 0.0
      %1165 = vmatpush1.msra.mxu0 0.0
      %1166 = vmatprep.subr.mxu0 0.0
      %1167 = vmatpush1.msra.mxu0 0.0
      %1168 = vmatprep.subr.mxu0 0.0
      %1169 = vmatpush1.msra.mxu0 0.0
      %1170 = vmatprep.subr.mxu0 0.0
      %1171 = vmatpush1.msra.mxu0 0.0
      %1172 = vmatprep.subr.mxu0 0.0
      %1173 = vmatpush1.msra.mxu0 0.0
      %1174 = vmatprep.subr.mxu0 0.0
      %1175 = vmatpush1.msra.mxu0 0.0
      %1176 = vmatprep.subr.mxu0 0.0
      %1177 = vmatpush1.msra.mxu0 0.0
      %1178 = vmatprep.subr.mxu0 0.0
      %1179 = vmatpush1.msra.mxu0 0.0
      %1180 = vmatprep.subr.mxu0 0.0
      %1181 = vmatpush1.msra.mxu0 0.0
      %1182 = vmatprep.subr.mxu0 0.0
      %1183 = vmatpush1.msra.mxu0 0.0
      %1184 = vmatprep.subr.mxu0 0.0
      %1185 = vmatpush1.msra.mxu0 0.0
      %1186 = vmatprep.subr.mxu0 0.0
      %1187 = vmatpush1.msra.mxu0 0.0
      %1188 = vmatprep.subr.mxu0 0.0
      %1189 = vmatpush1.msra.mxu0 0.0
      %1190 = vmatprep.subr.mxu0 0.0
      %1191 = vmatpush1.msra.mxu0 0.0
      %1192 = vmatprep.subr.mxu0 0.0
      %1193 = vmatpush1.msra.mxu0 0.0
      %1194 = vmatprep.subr.mxu0 0.0
      %1195 = vmatpush1.msra.mxu0 0.0
      %1196 = vmatprep.subr.mxu0 0.0
      %1197 = vmatpush1.msra.mxu0 0.0
      %1198 = vmatprep.subr.mxu0 0.0
      %1199 = vmatpush1.msra.mxu0 0.0
      %1200 = vmatprep.subr.mxu0 0.0
      %1201 = vmatpush1.msra.mxu0 0.0
      %1202 = vmatprep.subr.mxu0 0.0
      %1203 = vmatpush1.msra.mxu0 0.0
      %1204 = vmatprep.subr.mxu0 0.0
      %1205 = vmatpush1.msra.mxu0 0.0
      %1206 = vmatprep.subr.mxu0 0.0
      %1207 = vmatpush1.msra.mxu0 0.0
      %1208 = vmatprep.subr.mxu0 0.0
      %1209 = vmatpush1.msra.mxu0 0.0
      %1210 = vmatprep.subr.mxu0 0.0
      %1211 = vmatpush1.msra.mxu0 0.0
      %1212 = vmatprep.subr.mxu0 0.0
      %1213 = vmatpush1.msra.mxu0 0.0
      %1214 = vmatprep.subr.mxu0 0.0
      %1215 = vmatpush1.msra.mxu0 0.0
      %1216 = vmatprep.subr.mxu0 0.0
      %1217 = vmatpush1.msra.mxu0 0.0
      %1218 = vmatprep.subr.mxu0 0.0
      %1219 = vmatpush1.msra.mxu0 0.0
      %1220 = vmatprep.mubr.f32.mxu0 0.0
      %1221 = vmatmul.mubr.f32.gmra.mrb[0].mxu0 %v1151
      %v1222 = vpop.f32.mrb[0].mxu0
      %v1223 = vadd.f32 %v1143, %v1222
      %v1224 = vpop.f32.mrb[0].mxu0
      %v1225 = vadd.f32 %v1143, %v1224
      %1226 = vmatprep.mubr.f32.mxu0 0.0
      %1227 = vmatmul.mubr.f32.gmra.mrb[0].mxu0 %v1154
      %v1228 = vpop.f32.mrb[0].mxu0
      %v1229 = vadd.f32 %v1148, %v1228
      %v1230 = vpop.f32.mrb[0].mxu0
      %v1231 = vadd.f32 %v1148, %v1230
      %1232 = vdwg.mxu0
      %v1233 = vmax.f32 %v1223, 0.0
      %v1234 = vmax.f32 %v1225, 0.0
      %v1235 = vmax.f32 %v1229, 0.0
      %v1236 = vmax.f32 %v1231, 0.0
      %v1237 = vld [vmem:[%s9] sm:$0xff]
      %v1238 = vld [vmem:[%s10] sm:$0xff]
      %1240 = vset.pattern.permute.xlu0 0
      %1241 = vperm.xlu0 %1240, %v1238
      %v1242 = vpop.permute.xlu0 %1241
      %v1245 = vsel %vm832, %v1237, 0
      %1247 = vmatprep.subr.mxu0 %v1234
      %1248 = vmatpush1.msra.mxu0 %v1233
      %1249 = vmatprep.subr.mxu0 %v1236
      %1250 = vmatpush1.msra.mxu0 %v1235
      %1251 = vmatprep.subr.mxu0 0.0
      %1252 = vmatpush1.msra.mxu0 0.0
      %1253 = vmatprep.subr.mxu0 0.0
      %1254 = vmatpush1.msra.mxu0 0.0
      %1255 = vmatprep.subr.mxu0 0.0
      %1256 = vmatpush1.msra.mxu0 0.0
      %1257 = vmatprep.subr.mxu0 0.0
      %1258 = vmatpush1.msra.mxu0 0.0
      %1259 = vmatprep.subr.mxu0 0.0
      %1260 = vmatpush1.msra.mxu0 0.0
      %1261 = vmatprep.subr.mxu0 0.0
      %1262 = vmatpush1.msra.mxu0 0.0
      %1263 = vmatprep.subr.mxu0 0.0
      %1264 = vmatpush1.msra.mxu0 0.0
      %1265 = vmatprep.subr.mxu0 0.0
      %1266 = vmatpush1.msra.mxu0 0.0
      %1267 = vmatprep.subr.mxu0 0.0
      %1268 = vmatpush1.msra.mxu0 0.0
      %1269 = vmatprep.subr.mxu0 0.0
      %1270 = vmatpush1.msra.mxu0 0.0
      %1271 = vmatprep.subr.mxu0 0.0
      %1272 = vmatpush1.msra.mxu0 0.0
      %1273 = vmatprep.subr.mxu0 0.0
      %1274 = vmatpush1.msra.mxu0 0.0
      %1275 = vmatprep.subr.mxu0 0.0
      %1276 = vmatpush1.msra.mxu0 0.0
      %1277 = vmatprep.subr.mxu0 0.0
      %1278 = vmatpush1.msra.mxu0 0.0
      %1279 = vmatprep.subr.mxu0 0.0
      %1280 = vmatpush1.msra.mxu0 0.0
      %1281 = vmatprep.subr.mxu0 0.0
      %1282 = vmatpush1.msra.mxu0 0.0
      %1283 = vmatprep.subr.mxu0 0.0
      %1284 = vmatpush1.msra.mxu0 0.0
      %1285 = vmatprep.subr.mxu0 0.0
      %1286 = vmatpush1.msra.mxu0 0.0
      %1287 = vmatprep.subr.mxu0 0.0
      %1288 = vmatpush1.msra.mxu0 0.0
      %1289 = vmatprep.subr.mxu0 0.0
      %1290 = vmatpush1.msra.mxu0 0.0
      %1291 = vmatprep.subr.mxu0 0.0
      %1292 = vmatpush1.msra.mxu0 0.0
      %1293 = vmatprep.subr.mxu0 0.0
      %1294 = vmatpush1.msra.mxu0 0.0
      %1295 = vmatprep.subr.mxu0 0.0
      %1296 = vmatpush1.msra.mxu0 0.0
      %1297 = vmatprep.subr.mxu0 0.0
      %1298 = vmatpush1.msra.mxu0 0.0
      %1299 = vmatprep.subr.mxu0 0.0
      %1300 = vmatpush1.msra.mxu0 0.0
      %1301 = vmatprep.subr.mxu0 0.0
      %1302 = vmatpush1.msra.mxu0 0.0
      %1303 = vmatprep.subr.mxu0 0.0
      %1304 = vmatpush1.msra.mxu0 0.0
      %1305 = vmatprep.subr.mxu0 0.0
      %1306 = vmatpush1.msra.mxu0 0.0
      %1307 = vmatprep.subr.mxu0 0.0
      %1308 = vmatpush1.msra.mxu0 0.0
      %1309 = vmatprep.subr.mxu0 0.0
      %1310 = vmatpush1.msra.mxu0 0.0
      %1311 = vmatprep.mubr.f32.mxu0 0.0
      %1312 = vmatmul.mubr.f32.gmra.mrb[0].mxu0 %v1245
      %v1313 = vpop.f32.mrb[0].mxu0
      %v1314 = vadd.f32 %v1242, %v1313
      %v1315 = vpop.f32.mrb[0].mxu0
      %v1316 = vadd.f32 %v1242, %v1315
      %1317 = vdwg.mxu0
      %v1318 = vmax.f32 %v1314, 0.0
      %v1319 = vmax.f32 %v1316, 0.0
      %v1320 = vld [vmem:[%s11] sm:$0xff]
      %v1321 = vld [vmem:[%s12] sm:$0xff]
      %1323 = vset.pattern.permute.xlu0 0
      %1324 = vperm.xlu0 %1323, %v1320
      %v1325 = vpop.permute.xlu0 %1324
      %v1327 = vlaneseq
      %v1328 = vshrl.u32 %v1327, 7
      %v1329 = vsub.s32 0, %v1328
      %v1330 = vrot.slane %v1318, %v1329
      %v1331 = vlaneseq
      %v1332 = vshrl.u32 %v1331, 7
      %v1333 = vsub.s32 0, %v1332
      %v1334 = vrot.slane %v1319, %v1333
      %v1335 = vmul.f32 %v1325, %v1330
      %v1336 = vmul.f32 %v1325, %v1334
      %1337 = vset.pattern.permute.xlu0 1
      %1338 = vperm.xlu0 %1337, %v1320
      %v1339 = vpop.permute.xlu0 %1338
      %v1341 = vlaneseq
      %v1342 = vshrl.u32 %v1341, 7
      %v1343 = vsub.s32 1, %v1342
      %v1344 = vrot.slane %v1318, %v1343
      %v1345 = vlaneseq
      %v1346 = vshrl.u32 %v1345, 7
      %v1347 = vsub.s32 1, %v1346
      %v1348 = vrot.slane %v1319, %v1347
      %v1349 = vmul.f32 %v1339, %v1344
      %v1350 = vmul.f32 %v1339, %v1348
      %v1351 = vadd.f32 %v1335, %v1349
      %v1352 = vadd.f32 %v1336, %v1350
      %1353 = vset.pattern.permute.xlu0 2
      %1354 = vperm.xlu0 %1353, %v1320
      %v1355 = vpop.permute.xlu0 %1354
      %v1357 = vlaneseq
      %v1358 = vshrl.u32 %v1357, 7
      %v1359 = vsub.s32 2, %v1358
      %v1360 = vrot.slane %v1318, %v1359
      %v1361 = vlaneseq
      %v1362 = vshrl.u32 %v1361, 7
      %v1363 = vsub.s32 2, %v1362
      %v1364 = vrot.slane %v1319, %v1363
      %v1365 = vmul.f32 %v1355, %v1360
      %v1366 = vmul.f32 %v1355, %v1364
      %v1367 = vadd.f32 %v1351, %v1365
      %v1368 = vadd.f32 %v1352, %v1366
      %1369 = vset.pattern.permute.xlu0 3
      %1370 = vperm.xlu0 %1369, %v1320
      %v1371 = vpop.permute.xlu0 %1370
      %v1373 = vlaneseq
      %v1374 = vshrl.u32 %v1373, 7
      %v1375 = vsub.s32 3, %v1374
      %v1376 = vrot.slane %v1318, %v1375
      %v1377 = vlaneseq
      %v1378 = vshrl.u32 %v1377, 7
      %v1379 = vsub.s32 3, %v1378
      %v1380 = vrot.slane %v1319, %v1379
      %v1381 = vmul.f32 %v1371, %v1376
      %v1382 = vmul.f32 %v1371, %v1380
      %v1383 = vadd.f32 %v1367, %v1381
      %v1384 = vadd.f32 %v1368, %v1382
      %1385 = vset.pattern.permute.xlu0 4
      %1386 = vperm.xlu0 %1385, %v1320
      %v1387 = vpop.permute.xlu0 %1386
      %v1389 = vlaneseq
      %v1390 = vshrl.u32 %v1389, 7
      %v1391 = vsub.s32 4, %v1390
      %v1392 = vrot.slane %v1318, %v1391
      %v1393 = vlaneseq
      %v1394 = vshrl.u32 %v1393, 7
      %v1395 = vsub.s32 4, %v1394
      %v1396 = vrot.slane %v1319, %v1395
      %v1397 = vmul.f32 %v1387, %v1392
      %v1398 = vmul.f32 %v1387, %v1396
      %v1399 = vadd.f32 %v1383, %v1397
      %v1400 = vadd.f32 %v1384, %v1398
      %1401 = vset.pattern.permute.xlu0 5
      %1402 = vperm.xlu0 %1401, %v1320
      %v1403 = vpop.permute.xlu0 %1402
      %v1405 = vlaneseq
      %v1406 = vshrl.u32 %v1405, 7
      %v1407 = vsub.s32 5, %v1406
      %v1408 = vrot.slane %v1318, %v1407
      %v1409 = vlaneseq
      %v1410 = vshrl.u32 %v1409, 7
      %v1411 = vsub.s32 5, %v1410
      %v1412 = vrot.slane %v1319, %v1411
      %v1413 = vmul.f32 %v1403, %v1408
      %v1414 = vmul.f32 %v1403, %v1412
      %v1415 = vadd.f32 %v1399, %v1413
      %v1416 = vadd.f32 %v1400, %v1414
      %1417 = vset.pattern.permute.xlu0 6
      %1418 = vperm.xlu0 %1417, %v1320
      %v1419 = vpop.permute.xlu0 %1418
      %v1421 = vlaneseq
      %v1422 = vshrl.u32 %v1421, 7
      %v1423 = vsub.s32 6, %v1422
      %v1424 = vrot.slane %v1318, %v1423
      %v1425 = vlaneseq
      %v1426 = vshrl.u32 %v1425, 7
      %v1427 = vsub.s32 6, %v1426
      %v1428 = vrot.slane %v1319, %v1427
      %v1429 = vmul.f32 %v1419, %v1424
      %v1430 = vmul.f32 %v1419, %v1428
      %v1431 = vadd.f32 %v1415, %v1429
      %v1432 = vadd.f32 %v1416, %v1430
      %1433 = vset.pattern.permute.xlu0 7
      %1434 = vperm.xlu0 %1433, %v1320
      %v1435 = vpop.permute.xlu0 %1434
      %v1437 = vlaneseq
      %v1438 = vshrl.u32 %v1437, 7
      %v1439 = vsub.s32 7, %v1438
      %v1440 = vrot.slane %v1318, %v1439
      %v1441 = vlaneseq
      %v1442 = vshrl.u32 %v1441, 7
      %v1443 = vsub.s32 7, %v1442
      %v1444 = vrot.slane %v1319, %v1443
      %v1445 = vmul.f32 %v1435, %v1440
      %v1446 = vmul.f32 %v1435, %v1444
      %v1447 = vadd.f32 %v1431, %v1445
      %v1448 = vadd.f32 %v1432, %v1446
      %1450 = vset.pattern.permute.xlu0 0
      %1451 = vperm.xlu0 %1450, %v1321
      %v1452 = vpop.permute.xlu0 %1451
      %v1454 = vadd.f32 %v1447, %v1452
      %v1455 = vadd.f32 %v1448, %v1452
      %v1456 = vmax.f32 %v1454, 0.0
      %v1457 = vmax.f32 %v1455, 0.0
      %v1458 = vld [vmem:[%s13] sm:$0xff]
      %1460 = vset.pattern.permute.xlu0 0
      %1461 = vperm.xlu0 %1460, %v1458
      %v1462 = vpop.permute.xlu0 %1461
      %v1464 = vmul.f32 %v1462, %v1456
      %v1465 = vmul.f32 %v1462, %v1457
      %v1466 = vrot.slane %v1464, 4
      %v1467 = vadd.f32 %v1464, %v1466
      %v1468 = vrot.slane %v1467, 2
      %v1469 = vadd.f32 %v1467, %v1468
      %v1470 = vrot.slane %v1469, 1
      %v1471 = vadd.f32 %v1469, %v1470
      %v1472 = vrot.slane %v1465, 4
      %v1473 = vadd.f32 %v1465, %v1472
      %v1474 = vrot.slane %v1473, 2
      %v1475 = vadd.f32 %v1473, %v1474
      %v1476 = vrot.slane %v1475, 1
      %v1477 = vadd.f32 %v1475, %v1476
      %1478 = vset.pattern.permute.xlu0 1
      %1479 = vperm.xlu0 %1478, %v1458
      %v1480 = vpop.permute.xlu0 %1479
      %v1482 = vmul.f32 %v1480, %v1456
      %v1483 = vmul.f32 %v1480, %v1457
      %v1484 = vrot.slane %v1482, 4
      %v1485 = vadd.f32 %v1482, %v1484
      %v1486 = vrot.slane %v1485, 2
      %v1487 = vadd.f32 %v1485, %v1486
      %v1488 = vrot.slane %v1487, 1
      %v1489 = vadd.f32 %v1487, %v1488
      %v1490 = vrot.slane %v1483, 4
      %v1491 = vadd.f32 %v1483, %v1490
      %v1492 = vrot.slane %v1491, 2
      %v1493 = vadd.f32 %v1491, %v1492
      %v1494 = vrot.slane %v1493, 1
      %v1495 = vadd.f32 %v1493, %v1494
      %v1496 = vld [vmem:[%s14] sm:$0x1]
      %1498 = vset.pattern.permute.xlu0 0
      %1499 = vperm.xlu0 %1498, %v1496
      %v1500 = vpop.permute.xlu0 %1499
      %v1502 = vadd.f32 %v1471, %v1500
      %v1503 = vadd.f32 %v1477, %v1500
      %v1504 = vxor.u32 %v1502, 2147483648
      %v1505 = vxor.u32 %v1503, 2147483648
      %v1506 = vmul.f32 %v1504, 1.442695
      %v1507 = vpow.pop %v1506
      %v1508 = vmul.f32 %v1505, 1.442695
      %v1509 = vpow.pop %v1508
      %v1510 = vadd.f32 %v1507, 1.0
      %v1511 = vadd.f32 %v1509, 1.0
      %v1512 = vrcp.pop %v1510
      %v1513 = vmul.f32 1.0, %v1512
      %v1514 = vrcp.pop %v1511
      %v1515 = vmul.f32 1.0, %v1514
      %v1518 = vcombine.low %v1513, %v1515
      %v1520 = vunpack.c.l.s4 1966171168
      %v1521 = vunpack.c.0.s8 %v1520
      %v1522 = vlaneseq
      %v1523 = vshrl.u32 %v1522, 7
      %v1524 = vsub.s32 %v1521, %v1523
      %v1525 = vrot.slane %v1518, %v1524
      %v1527 = vunpack.c.l.s4 1966171168
      %v1528 = vunpack.c.0.s8 %v1527
      %v1529 = vlaneseq
      %v1530 = vshrl.u32 %v1529, 7
      %v1531 = vsub.s32 %v1528, %v1530
      %v1532 = vrot.slane %v1525, %v1531
      %v1534 = vlaneseq
      %vm1535 = vcmp.ge.s32.totalorder %v1534, 0
      %vm1536 = vcmp.lt.s32.totalorder %v1534, 256
      %vm1537 = vmand %vm1535, %vm1536
      %1538 = vst.msk [vmem:[%s496] ss:$2 sm:$0x3] %vm1537, %v1532
      %v1539 = vld [vmem:[%s14 + $0x1] sm:$0x1]
      %1541 = vset.pattern.permute.xlu0 0
      %1542 = vperm.xlu0 %1541, %v1539
      %v1543 = vpop.permute.xlu0 %1542
      %v1545 = vadd.f32 %v1489, %v1543
      %v1546 = vadd.f32 %v1495, %v1543
      %v1547 = vxor.u32 %v1545, 2147483648
      %v1548 = vxor.u32 %v1546, 2147483648
      %v1549 = vmul.f32 %v1547, 1.442695
      %v1550 = vpow.pop %v1549
      %v1551 = vmul.f32 %v1548, 1.442695
      %v1552 = vpow.pop %v1551
      %v1553 = vadd.f32 %v1550, 1.0
      %v1554 = vadd.f32 %v1552, 1.0
      %v1555 = vrcp.pop %v1553
      %v1556 = vmul.f32 1.0, %v1555
      %v1557 = vrcp.pop %v1554
      %v1558 = vmul.f32 1.0, %v1557
      %v1561 = vcombine.low %v1556, %v1558
      %v1563 = vunpack.c.l.s4 1966171168
      %v1564 = vunpack.c.0.s8 %v1563
      %v1565 = vlaneseq
      %v1566 = vshrl.u32 %v1565, 7
      %v1567 = vsub.s32 %v1564, %v1566
      %v1568 = vrot.slane %v1561, %v1567
      %v1570 = vunpack.c.l.s4 1966171168
      %v1571 = vunpack.c.0.s8 %v1570
      %v1572 = vlaneseq
      %v1573 = vshrl.u32 %v1572, 7
      %v1574 = vsub.s32 %v1571, %v1573
      %v1575 = vrot.slane %v1568, %v1574
      %s1577 = scalar_lea.vmem %s496, 1
      %1578 = vst.msk [vmem:[%s1577] ss:$2 sm:$0x3] %vm1537, %v1575
      %s1579 = smul.u32 2, %s26
      %p1580 = scmp.lt.s32.totalorder %s1579, 3
      %s1581 = scalar_select %p1580, %s1579, 3
      %s1582 = smul.addr %s1581, 2
      %s1583 = scalar_lea.vmem %s15, %s1582
      // Predicated region
      $region81: #{ae_cnn_forward.1} parent=79 // pred_check
        %p1584 = pneg %p364
      $region82: #{ae_cnn_forward.1} parent=79 // pred_check_branch
        %1586 = sbr.rel (%p1584) target = $region84
      $region83: #{ae_cnn_forward.1} parent=79 // pred_region
        %s1587 = smul.u32 2, %s26
      $region84: #{ae_cnn_forward.1} parent=79 // pred_fallthru
        _
    $region80: #{ae_cnn_forward.1} parent=5 // pred_fallthru
      _
    %p1588 = scmp.le.s32.totalorder 2, %s21
    // Predicated region
    $region85: #{ae_cnn_forward.1} parent=5 // pred_check
      %p1589 = pneg %p1588
    $region86: #{ae_cnn_forward.1} parent=5 // pred_check_branch
      %1591 = sbr.rel (%p1589) target = $region88
    $region87: #{ae_cnn_forward.1} parent=5 // pred_region
      %s1592 = ssub.s32 %s21, 2
      // Predicated region
      $region89: #{ae_cnn_forward.1} parent=87 // pred_check
        %p1593 = pneg %p370
      $region90: #{ae_cnn_forward.1} parent=87 // pred_check_branch
        %1595 = sbr.rel (%p1593) target = $region92
      $region91: #{ae_cnn_forward.1} parent=87 // pred_region
        %s1596 = smul.u32 2, %s27
        %p1597 = scmp.lt.s32.totalorder %s1596, 3
        %s1598 = scalar_select %p1597, %s1596, 3
        %s1599 = smul.addr %s1598, 2
        %s1600 = scalar_lea.vmem %s15, %s1599
      $region92: #{ae_cnn_forward.1} parent=87 // pred_fallthru
        _
    $region88: #{ae_cnn_forward.1} parent=5 // pred_fallthru
      _
  $region6: #{ae_cnn_forward.1} parent=0 // loop_footer
    %s25 = sadd.s32 1, %s21
  $region7: #{ae_cnn_forward.1} parent=0 // loop_footer_branch
    %20 = sbr.rel target = $region3
  $region8: #{ae_cnn_forward.1} parent=0 // loop_exit
    _

</llo_original>
